<compile_context>
chip_gen: v6e
topology: v6e:2x2x1
jax: 0.10.0
libtpu: 0.0.40
codegen_flags: <defaults>
</compile_context>

<pallas_src>
import jax
import jax.numpy as jnp
from jax.experimental import pallas as pl
from jax.experimental.pallas import tpu as pltpu

K = 3                 # kernel_size
KK = K * K
PAD = (K - 1) // 2


def get_offset(anchors, featmap_size, stride):
    """JAX port of AlignConv.get_offset. anchors: (A, 5) = (x, y, w, h, angle)."""
    feat_h, feat_w = featmap_size
    dtype = anchors.dtype
    idx = jnp.arange(-PAD, PAD + 1, dtype=dtype)
    yy, xx = jnp.meshgrid(idx, idx, indexing="ij")
    xx = xx.reshape(-1)
    yy = yy.reshape(-1)
    xc = jnp.arange(0, feat_w, dtype=dtype)
    yc = jnp.arange(0, feat_h, dtype=dtype)
    yc, xc = jnp.meshgrid(yc, xc, indexing="ij")
    xc = xc.reshape(-1)
    yc = yc.reshape(-1)
    x_conv = xc[:, None] + xx
    y_conv = yc[:, None] + yy

    x_ctr, y_ctr, w, h, a = (anchors[:, i] for i in range(5))
    x_ctr, y_ctr, w, h = x_ctr / stride, y_ctr / stride, w / stride, h / stride
    cos, sin = jnp.cos(a), jnp.sin(a)
    dw, dh = w / K, h / K
    xk, yk = dw[:, None] * xx, dh[:, None] * yy
    xr = cos[:, None] * xk - sin[:, None] * yk
    yr = sin[:, None] * xk + cos[:, None] * yk
    x_anchor, y_anchor = xr + x_ctr[:, None], yr + y_ctr[:, None]
    offset_x = x_anchor - x_conv
    offset_y = y_anchor - y_conv
    offset = jnp.stack([offset_y, offset_x], axis=-1)              # (A, KK, 2)
    offset = offset.reshape(anchors.shape[0], -1).T.reshape(-1, feat_h, feat_w)
    return offset                                                  # (2*KK, H, W)


def _deform_im2col_parts(x_img, offset_img):
    """Bilinear corner values (C*KK, P) & bilinear weights (KK, P) for one image.

    TODO(synk): the data-dependent bilinear gather has no clean Pallas TPU
    equivalent, so the index/gather step stays in JAX/XLA; the bilinear
    combine, conv reduction (matmul) and ReLU run inside the Pallas kernel.
    """
    C, H, W = x_img.shape
    dtype = x_img.dtype
    off = offset_img.reshape(KK, 2, H, W)
    dy, dx = off[:, 0], off[:, 1]                                  # (KK, H, W)
    kh, kw = jnp.meshgrid(jnp.arange(K, dtype=dtype),
                          jnp.arange(K, dtype=dtype), indexing="ij")
    kh = kh.reshape(-1)
    kw = kw.reshape(-1)
    hh, ww = jnp.meshgrid(jnp.arange(H, dtype=dtype),
                          jnp.arange(W, dtype=dtype), indexing="ij")
    py = hh[None] - PAD + kh[:, None, None] + dy                   # (KK, H, W)
    px = ww[None] - PAD + kw[:, None, None] + dx
    valid = ((py > -1) & (py < H) & (px > -1) & (px < W)).astype(dtype)

    y0 = jnp.floor(py)
    x0 = jnp.floor(px)
    ly = py - y0
    lx = px - x0
    y0i = y0.astype(jnp.int32)
    x0i = x0.astype(jnp.int32)

    def gather(yi, xi):
        inb = ((yi >= 0) & (yi < H) & (xi >= 0) & (xi < W)).astype(dtype)
        yc = jnp.clip(yi, 0, H - 1)
        xc = jnp.clip(xi, 0, W - 1)
        v = x_img[:, yc, xc]                                       # (C, KK, H, W)
        return v * inb[None]

    v00 = gather(y0i, x0i)
    v01 = gather(y0i, x0i + 1)
    v10 = gather(y0i + 1, x0i)
    v11 = gather(y0i + 1, x0i + 1)
    w00 = (1.0 - ly) * (1.0 - lx) * valid
    w01 = (1.0 - ly) * lx * valid
    w10 = ly * (1.0 - lx) * valid
    w11 = ly * lx * valid

    P = H * W

    def v_flat(v):   # (C, KK, H, W) -> (C*KK, P): copy-free collapse, P stays last (lane) dim
        return v.reshape(C * KK, P)

    def w_flat(w):   # (KK, H, W) -> (KK, P): no C-broadcast here (done in-kernel)
        return w.reshape(KK, P)

    return (v_flat(v00), v_flat(v01), v_flat(v10), v_flat(v11),
            w_flat(w00), w_flat(w01), w_flat(w10), w_flat(w11))


def _pick_tile(P, CKK, O):
    """Largest lane-tile (multiple of 128) that divides P, gives >=2 grid steps
    when possible, and keeps double-buffered VMEM well under v7x's 32 MiB scope."""
    bytes_per_lane = 2 * (4 * CKK + 4 * KK) * 2 + 2 * O * 4   # 2x buffered bf16 in + f32 out
    budget = 24 * 1024 * 1024
    cap = max(128, (budget // bytes_per_lane) // 128 * 128)
    for tp in (512, 256, 128):
        if P % tp == 0 and tp <= cap and P // tp >= 2:
            return tp
    for tp in (512, 256, 128):
        if P % tp == 0 and tp <= cap:
            return tp
    return P


def align_deform_kernel(v00, v01, v10, v11, w00, w01, w10, w11,
                        e_ref, wt_ref, o_ref):
    """Hot path on one (rows, TP) tile: C-broadcast of bilinear weights (via a
    tiny constant 0/1 matmul), bilinear combine, conv reduction, ReLU."""
    f32 = jnp.float32
    e = e_ref[...]                                                 # (CKK, KK) 0/1

    def expand(w_ref):
        # (KK, TP) bf16 -> f32 -> broadcast over C via expansion matmul -> (CKK, TP)
        return jnp.dot(e, w_ref[0].astype(f32), preferred_element_type=f32)

    cols = (v00[0].astype(f32) * expand(w00) +
            v01[0].astype(f32) * expand(w01) +
            v10[0].astype(f32) * expand(w10) +
            v11[0].astype(f32) * expand(w11))                      # (CKK, TP)
    acc = jnp.dot(wt_ref[...], cols, preferred_element_type=f32)   # (O, TP)
    o_ref[0] = jnp.maximum(acc, 0.0).astype(o_ref.dtype)


def _prepare_streams(x, anchors, stride, weight):
    N, C, H, W = x.shape
    O = weight.shape[0]
    offsets = jax.vmap(
        lambda a: get_offset(a.reshape(-1, 5), (H, W), stride))(anchors)
    parts = jax.vmap(_deform_im2col_parts)(x, offsets)
    vparts = tuple(p.astype(jnp.bfloat16) for p in parts[:4])      # (N, C*KK, P) bf16
    wparts = tuple(p.astype(jnp.bfloat16) for p in parts[4:])      # (N, KK, P)   bf16
    wflat = weight.reshape(O, C * KK).astype(jnp.float32)          # (O, C*KK)
    return vparts, wparts, wflat


def align_conv_forward(x, anchors, stride, weight):
    """AlignConv.forward: relu(deform_conv(x, get_offset(anchors, stride)))."""
    N, C, H, W = x.shape
    O = weight.shape[0]
    P = H * W
    CKK = C * KK

    vparts, wparts, wflat = _prepare_streams(x, anchors, stride, weight)
    # Constant 0/1 expansion matrix: expand[c*KK + k, k'] = (k == k').
    expand = (jnp.arange(CKK)[:, None] % KK
              == jnp.arange(KK)[None, :]).astype(jnp.float32)      # (CKK, KK)

    TP = _pick_tile(P, CKK, O)
    grid = (N, P // TP)
    val_spec = pl.BlockSpec((1, CKK, TP), lambda n, p: (n, 0, p))
    wgt_spec = pl.BlockSpec((1, KK, TP), lambda n, p: (n, 0, p))

    out_flat = pl.pallas_call(
        align_deform_kernel,
        out_shape=jax.ShapeDtypeStruct((N, O, P), jnp.float32),
        grid_spec=pltpu.PrefetchScalarGridSpec(
            num_scalar_prefetch=0,
            grid=grid,
            in_specs=[val_spec] * 4 + [wgt_spec] * 4 + [
                pl.BlockSpec((CKK, KK), lambda n, p: (0, 0)),      # expansion (resident)
                pl.BlockSpec((O, CKK), lambda n, p: (0, 0)),       # conv weight (resident)
            ],
            out_specs=pl.BlockSpec((1, O, TP), lambda n, p: (n, 0, p)),
        ),
        compiler_params=pltpu.CompilerParams(
            dimension_semantics=("parallel", "parallel")),
    )(*vparts, *wparts, expand, wflat)

    # P-last output already matches NCHW -> copy-free reshape.
    return out_flat.reshape(N, O, H, W)


def _reference_from_streams(vparts, wparts, wflat, N, C, O, H, W):
    P = H * W
    v = [p.astype(jnp.float32) for p in vparts]
    w = [p.astype(jnp.float32) for p in wparts]
    cols = sum(vv.reshape(N, C, KK, P) * ww[:, None]
               for vv, ww in zip(v, w)).reshape(N, C * KK, P)
    out = jnp.maximum(jnp.einsum("oj,njp->nop", wflat, cols), 0.0)
    return out.reshape(N, O, H, W)


def align_conv_reference_bf16(x, anchors, stride, weight):
    """Pure-JAX reference consuming the exact bf16 streams fed to the kernel."""
    N, C, H, W = x.shape
    O = weight.shape[0]
    vparts, wparts, wflat = _prepare_streams(x, anchors, stride, weight)
    return _reference_from_streams(vparts, wparts, wflat, N, C, O, H, W)


def align_conv_reference_f32(x, anchors, stride, weight):
    """Pure-JAX full-f32 reference (original module semantics, no bf16 storage)."""
    N, C, H, W = x.shape
    O = weight.shape[0]
    offsets = jax.vmap(
        lambda a: get_offset(a.reshape(-1, 5), (H, W), stride))(anchors)
    parts = jax.vmap(_deform_im2col_parts)(x, offsets)
    wflat = weight.reshape(O, C * KK).astype(jnp.float32)
    return _reference_from_streams(parts[:4], parts[4:], wflat, N, C, O, H, W)


if __name__ == "__main__":
    N, C, H, W = 2, 4, 16, 16
    O = 8
    stride = 8.0

    key = jax.random.PRNGKey(0)
    kx, kwt, k1, k2, k3, k4 = jax.random.split(key, 6)

    x = jax.random.normal(kx, (N, C, H, W), dtype=jnp.float32)

    gy, gx = jnp.meshgrid(jnp.arange(H, dtype=jnp.float32),
                          jnp.arange(W, dtype=jnp.float32), indexing="ij")
    x_ctr = (gx + 0.5) * stride + jax.random.uniform(k1, (N, H, W), minval=-2.0, maxval=2.0)
    y_ctr = (gy + 0.5) * stride + jax.random.uniform(k2, (N, H, W), minval=-2.0, maxval=2.0)
    wh = stride * jax.random.uniform(k3, (N, H, W, 2), minval=2.0, maxval=6.0)
    ang = jax.random.uniform(k4, (N, H, W), minval=-1.5, maxval=1.5)
    anchors = jnp.stack([x_ctr, y_ctr, wh[..., 0], wh[..., 1], ang], axis=-1)  # (N,H,W,5)

    # deform_conv weight (out_channels, in_channels, K, K); normal_init std=0.01, no bias.
    weight = 0.01 * jax.random.normal(kwt, (O, C, K, K), dtype=jnp.float32)

    out = align_conv_forward(x, anchors, stride, weight)
    out = jax.block_until_ready(out)
    assert out.shape == (N, O, H, W)

    # Tight check: same bf16 streams, validates the Pallas kernel math exactly.
    ref_bf16 = align_conv_reference_bf16(x, anchors, stride, weight)
    assert bool(jnp.allclose(out, ref_bf16, rtol=1e-2, atol=1e-3)), "mismatch vs bf16-matched ref"

    # Fidelity check vs original full-f32 semantics (bf16 storage introduces ~0.1% noise).
    ref_f32 = align_conv_reference_f32(x, anchors, stride, weight)
    assert bool(jnp.allclose(out, ref_f32, rtol=5e-2, atol=5e-3)), "mismatch vs f32 reference"

    print("KERNEL_OK")
</pallas_src>

<mosaic_0001>
module attributes {stable_mosaic.version = 11 : i64} {
  func.func @align_deform_kernel(%arg0: i32, %arg1: i32, %arg2: memref<1x36x128xbf16, #tpu.memory_space<vmem>>, %arg3: memref<1x36x128xbf16, #tpu.memory_space<vmem>>, %arg4: memref<1x36x128xbf16, #tpu.memory_space<vmem>>, %arg5: memref<1x36x128xbf16, #tpu.memory_space<vmem>>, %arg6: memref<1x9x128xbf16, #tpu.memory_space<vmem>>, %arg7: memref<1x9x128xbf16, #tpu.memory_space<vmem>>, %arg8: memref<1x9x128xbf16, #tpu.memory_space<vmem>>, %arg9: memref<1x9x128xbf16, #tpu.memory_space<vmem>>, %arg10: memref<36x9xf32, #tpu.memory_space<vmem>>, %arg11: memref<8x36xf32, #tpu.memory_space<vmem>>, %arg12: memref<1x8x128xf32, #tpu.memory_space<vmem>>) attributes {dimension_semantics = [#tpu.dimension_semantics<parallel>, #tpu.dimension_semantics<parallel>], iteration_bounds = array<i64: 2, 2>, scalar_prefetch = 0 : i64, scratch_operands = 0 : i64, tpu.core_type = #tpu.core_type<tc>, window_params = [{transform_indices = @transform_0, window_bounds = array<i64: 1, 36, 128>}, {transform_indices = @transform_1, window_bounds = array<i64: 1, 36, 128>}, {transform_indices = @transform_2, window_bounds = array<i64: 1, 36, 128>}, {transform_indices = @transform_3, window_bounds = array<i64: 1, 36, 128>}, {transform_indices = @transform_4, window_bounds = array<i64: 1, 9, 128>}, {transform_indices = @transform_5, window_bounds = array<i64: 1, 9, 128>}, {transform_indices = @transform_6, window_bounds = array<i64: 1, 9, 128>}, {transform_indices = @transform_7, window_bounds = array<i64: 1, 9, 128>}, {pipeline_mode = #tpu.pipeline_mode<synchronous>, transform_indices = @transform_8, window_bounds = array<i64: 36, 9>}, {pipeline_mode = #tpu.pipeline_mode<synchronous>, transform_indices = @transform_9, window_bounds = array<i64: 8, 36>}, {transform_indices = @transform_10, window_bounds = array<i64: 1, 8, 128>}]} {
    %c0 = arith.constant 0 : index
    %c0_0 = arith.constant 0 : index
    %0 = vector.load %arg10[%c0, %c0_0] : memref<36x9xf32, #tpu.memory_space<vmem>>, vector<36x9xf32>
    %c0_1 = arith.constant 0 : index
    %c0_2 = arith.constant 0 : index
    %c0_3 = arith.constant 0 : index
    %1 = vector.load %arg2[%c0_1, %c0_2, %c0_3] : memref<1x36x128xbf16, #tpu.memory_space<vmem>>, vector<1x36x128xbf16>
    %2 = vector.shape_cast %1 : vector<1x36x128xbf16> to vector<36x128xbf16>
    %3 = arith.extf %2 : vector<36x128xbf16> to vector<36x128xf32>
    %c0_4 = arith.constant 0 : index
    %c0_5 = arith.constant 0 : index
    %c0_6 = arith.constant 0 : index
    %4 = vector.load %arg6[%c0_4, %c0_5, %c0_6] : memref<1x9x128xbf16, #tpu.memory_space<vmem>>, vector<1x9x128xbf16>
    %5 = vector.shape_cast %4 : vector<1x9x128xbf16> to vector<9x128xbf16>
    %6 = arith.extf %5 : vector<9x128xbf16> to vector<9x128xf32>
    %cst = arith.constant dense<0.000000e+00> : vector<36x128xf32>
    %7 = tpu.matmul %0, %6, %cst {dimension_numbers = #tpu.dot_dimension_numbers<[1], [0], [0], [1], [0, 0, 1, 1], [], []>} : vector<36x9xf32>, vector<9x128xf32>, vector<36x128xf32> -> vector<36x128xf32>
    %8 = arith.mulf %3, %7 : vector<36x128xf32>
    %c0_7 = arith.constant 0 : index
    %c0_8 = arith.constant 0 : index
    %c0_9 = arith.constant 0 : index
    %9 = vector.load %arg3[%c0_7, %c0_8, %c0_9] : memref<1x36x128xbf16, #tpu.memory_space<vmem>>, vector<1x36x128xbf16>
    %10 = vector.shape_cast %9 : vector<1x36x128xbf16> to vector<36x128xbf16>
    %11 = arith.extf %10 : vector<36x128xbf16> to vector<36x128xf32>
    %c0_10 = arith.constant 0 : index
    %c0_11 = arith.constant 0 : index
    %c0_12 = arith.constant 0 : index
    %12 = vector.load %arg7[%c0_10, %c0_11, %c0_12] : memref<1x9x128xbf16, #tpu.memory_space<vmem>>, vector<1x9x128xbf16>
    %13 = vector.shape_cast %12 : vector<1x9x128xbf16> to vector<9x128xbf16>
    %14 = arith.extf %13 : vector<9x128xbf16> to vector<9x128xf32>
    %cst_13 = arith.constant dense<0.000000e+00> : vector<36x128xf32>
    %15 = tpu.matmul %0, %14, %cst_13 {dimension_numbers = #tpu.dot_dimension_numbers<[1], [0], [0], [1], [0, 0, 1, 1], [], []>} : vector<36x9xf32>, vector<9x128xf32>, vector<36x128xf32> -> vector<36x128xf32>
    %16 = arith.mulf %11, %15 : vector<36x128xf32>
    %17 = arith.addf %8, %16 : vector<36x128xf32>
    %c0_14 = arith.constant 0 : index
    %c0_15 = arith.constant 0 : index
    %c0_16 = arith.constant 0 : index
    %18 = vector.load %arg4[%c0_14, %c0_15, %c0_16] : memref<1x36x128xbf16, #tpu.memory_space<vmem>>, vector<1x36x128xbf16>
    %19 = vector.shape_cast %18 : vector<1x36x128xbf16> to vector<36x128xbf16>
    %20 = arith.extf %19 : vector<36x128xbf16> to vector<36x128xf32>
    %c0_17 = arith.constant 0 : index
    %c0_18 = arith.constant 0 : index
    %c0_19 = arith.constant 0 : index
    %21 = vector.load %arg8[%c0_17, %c0_18, %c0_19] : memref<1x9x128xbf16, #tpu.memory_space<vmem>>, vector<1x9x128xbf16>
    %22 = vector.shape_cast %21 : vector<1x9x128xbf16> to vector<9x128xbf16>
    %23 = arith.extf %22 : vector<9x128xbf16> to vector<9x128xf32>
    %cst_20 = arith.constant dense<0.000000e+00> : vector<36x128xf32>
    %24 = tpu.matmul %0, %23, %cst_20 {dimension_numbers = #tpu.dot_dimension_numbers<[1], [0], [0], [1], [0, 0, 1, 1], [], []>} : vector<36x9xf32>, vector<9x128xf32>, vector<36x128xf32> -> vector<36x128xf32>
    %25 = arith.mulf %20, %24 : vector<36x128xf32>
    %26 = arith.addf %17, %25 : vector<36x128xf32>
    %c0_21 = arith.constant 0 : index
    %c0_22 = arith.constant 0 : index
    %c0_23 = arith.constant 0 : index
    %27 = vector.load %arg5[%c0_21, %c0_22, %c0_23] : memref<1x36x128xbf16, #tpu.memory_space<vmem>>, vector<1x36x128xbf16>
    %28 = vector.shape_cast %27 : vector<1x36x128xbf16> to vector<36x128xbf16>
    %29 = arith.extf %28 : vector<36x128xbf16> to vector<36x128xf32>
    %c0_24 = arith.constant 0 : index
    %c0_25 = arith.constant 0 : index
    %c0_26 = arith.constant 0 : index
    %30 = vector.load %arg9[%c0_24, %c0_25, %c0_26] : memref<1x9x128xbf16, #tpu.memory_space<vmem>>, vector<1x9x128xbf16>
    %31 = vector.shape_cast %30 : vector<1x9x128xbf16> to vector<9x128xbf16>
    %32 = arith.extf %31 : vector<9x128xbf16> to vector<9x128xf32>
    %cst_27 = arith.constant dense<0.000000e+00> : vector<36x128xf32>
    %33 = tpu.matmul %0, %32, %cst_27 {dimension_numbers = #tpu.dot_dimension_numbers<[1], [0], [0], [1], [0, 0, 1, 1], [], []>} : vector<36x9xf32>, vector<9x128xf32>, vector<36x128xf32> -> vector<36x128xf32>
    %34 = arith.mulf %29, %33 : vector<36x128xf32>
    %35 = arith.addf %26, %34 : vector<36x128xf32>
    %c0_28 = arith.constant 0 : index
    %c0_29 = arith.constant 0 : index
    %36 = vector.load %arg11[%c0_28, %c0_29] : memref<8x36xf32, #tpu.memory_space<vmem>>, vector<8x36xf32>
    %cst_30 = arith.constant dense<0.000000e+00> : vector<8x128xf32>
    %37 = tpu.matmul %36, %35, %cst_30 {dimension_numbers = #tpu.dot_dimension_numbers<[1], [0], [0], [1], [0, 0, 1, 1], [], []>} : vector<8x36xf32>, vector<36x128xf32>, vector<8x128xf32> -> vector<8x128xf32>
    %cst_31 = arith.constant 0.000000e+00 : f32
    %38 = vector.broadcast %cst_31 : f32 to vector<8x128xf32>
    %39 = arith.maximumf %37, %38 : vector<8x128xf32>
    %c0_32 = arith.constant 0 : index
    %c0_33 = arith.constant 0 : index
    %c0_34 = arith.constant 0 : index
    %40 = vector.load %arg12[%c0_32, %c0_33, %c0_34] : memref<1x8x128xf32, #tpu.memory_space<vmem>>, vector<1x8x128xf32>
    %41 = vector.shape_cast %40 : vector<1x8x128xf32> to vector<8x128xf32>
    %42 = vector.shape_cast %39 : vector<8x128xf32> to vector<1x8x128xf32>
    tpu.vector_store %arg12[%c0_32, %c0_33, %c0_34], %42 {strides = array<i32>} : memref<1x8x128xf32, #tpu.memory_space<vmem>>, vector<1x8x128xf32>,
    return
  }
  func.func @transform_0(%arg0: i32, %arg1: i32) -> (i32, i32, i32) {
    %c0_i32 = arith.constant 0 : i32
    %c0_i32_0 = arith.constant 0 : i32
    return %arg0, %c0_i32, %arg1 : i32, i32, i32
  }
  func.func @transform_1(%arg0: i32, %arg1: i32) -> (i32, i32, i32) {
    %c0_i32 = arith.constant 0 : i32
    %c0_i32_0 = arith.constant 0 : i32
    return %arg0, %c0_i32, %arg1 : i32, i32, i32
  }
  func.func @transform_2(%arg0: i32, %arg1: i32) -> (i32, i32, i32) {
    %c0_i32 = arith.constant 0 : i32
    %c0_i32_0 = arith.constant 0 : i32
    return %arg0, %c0_i32, %arg1 : i32, i32, i32
  }
  func.func @transform_3(%arg0: i32, %arg1: i32) -> (i32, i32, i32) {
    %c0_i32 = arith.constant 0 : i32
    %c0_i32_0 = arith.constant 0 : i32
    return %arg0, %c0_i32, %arg1 : i32, i32, i32
  }
  func.func @transform_4(%arg0: i32, %arg1: i32) -> (i32, i32, i32) {
    %c0_i32 = arith.constant 0 : i32
    %c0_i32_0 = arith.constant 0 : i32
    return %arg0, %c0_i32, %arg1 : i32, i32, i32
  }
  func.func @transform_5(%arg0: i32, %arg1: i32) -> (i32, i32, i32) {
    %c0_i32 = arith.constant 0 : i32
    %c0_i32_0 = arith.constant 0 : i32
    return %arg0, %c0_i32, %arg1 : i32, i32, i32
  }
  func.func @transform_6(%arg0: i32, %arg1: i32) -> (i32, i32, i32) {
    %c0_i32 = arith.constant 0 : i32
    %c0_i32_0 = arith.constant 0 : i32
    return %arg0, %c0_i32, %arg1 : i32, i32, i32
  }
  func.func @transform_7(%arg0: i32, %arg1: i32) -> (i32, i32, i32) {
    %c0_i32 = arith.constant 0 : i32
    %c0_i32_0 = arith.constant 0 : i32
    return %arg0, %c0_i32, %arg1 : i32, i32, i32
  }
  func.func @transform_8(%arg0: i32, %arg1: i32) -> (i32, i32) {
    %c0_i32 = arith.constant 0 : i32
    %c0_i32_0 = arith.constant 0 : i32
    %c0_i32_1 = arith.constant 0 : i32
    return %c0_i32, %c0_i32_0 : i32, i32
  }
  func.func @transform_9(%arg0: i32, %arg1: i32) -> (i32, i32) {
    %c0_i32 = arith.constant 0 : i32
    %c0_i32_0 = arith.constant 0 : i32
    %c0_i32_1 = arith.constant 0 : i32
    return %c0_i32, %c0_i32_0 : i32, i32
  }
  func.func @transform_10(%arg0: i32, %arg1: i32) -> (i32, i32, i32) {
    %c0_i32 = arith.constant 0 : i32
    %c0_i32_0 = arith.constant 0 : i32
    return %arg0, %c0_i32, %arg1 : i32, i32, i32
  }
}

</mosaic_0001>

<llo_original>
// kernel: tpu_custom_call.1
$region0: #{tpu_custom_call.1}
  #allocation0 [shape = 'u32[]', space=smem, size = 0x4, offset = 0x4, fixed_abs, tag = 'smem constant byte address 0x4 - core index']
  #allocation1 [shape = 'u32[144,128]{1,0:T(1,128)}', space=vmem, size = 0x12000, scoped, tag = 'internal scratch']
  %s0 = inlined_call_operand.vmem [shape: bf16[2,36,256], index: 0, kind: input, shape index: {}]
  %s1 = inlined_call_operand.vmem [shape: bf16[2,36,256], index: 1, kind: input, shape index: {}]
  %s2 = inlined_call_operand.vmem [shape: bf16[2,36,256], index: 2, kind: input, shape index: {}]
  %s3 = inlined_call_operand.vmem [shape: bf16[2,36,256], index: 3, kind: input, shape index: {}]
  %s4 = inlined_call_operand.vmem [shape: bf16[2,9,256], index: 4, kind: input, shape index: {}]
  %s5 = inlined_call_operand.vmem [shape: bf16[2,9,256], index: 5, kind: input, shape index: {}]
  %s6 = inlined_call_operand.vmem [shape: bf16[2,9,256], index: 6, kind: input, shape index: {}]
  %s7 = inlined_call_operand.vmem [shape: bf16[2,9,256], index: 7, kind: input, shape index: {}]
  %s8 = inlined_call_operand.vmem [shape: f32[36,9], index: 8, kind: input, shape index: {}]
  %s9 = inlined_call_operand.vmem [shape: f32[8,36], index: 9, kind: input, shape index: {}]
  %s10 = inlined_call_operand.hbm [shape: f32[2,8,256], index: 10, kind: output, shape index: {}]
  %s11 = sld [smem:[#allocation0]]
  $region401: #{tpu_custom_call.1} parent=0
    _
  %s13 = ssub.s32 1, %s11
  %s14 = scalar_select 0, %s13, %s11
  $region1: #{tpu_custom_call.1} parent=0
    #allocation2 [shape = 'u8[20480]{0}', space=vmem, size = 0x5000, scoped, tag = 'input window, operand 0']
    #allocation3 [shape = 'u8[20480]{0}', space=vmem, size = 0x5000, scoped, tag = 'input window, operand 1']
    #allocation4 [shape = 'u8[20480]{0}', space=vmem, size = 0x5000, scoped, tag = 'input window, operand 2']
    #allocation5 [shape = 'u8[20480]{0}', space=vmem, size = 0x5000, scoped, tag = 'input window, operand 3']
    #allocation6 [shape = 'u8[8192]{0}', space=vmem, size = 0x2000, scoped, tag = 'input window, operand 4']
    #allocation7 [shape = 'u8[8192]{0}', space=vmem, size = 0x2000, scoped, tag = 'input window, operand 5']
    #allocation8 [shape = 'u8[8192]{0}', space=vmem, size = 0x2000, scoped, tag = 'input window, operand 6']
    #allocation9 [shape = 'u8[8192]{0}', space=vmem, size = 0x2000, scoped, tag = 'input window, operand 7']
    #allocation10 [shape = 'u8[8192]{0}', space=vmem, size = 0x2000, scoped, tag = 'output window, operand 0']
    #allocation11 [shape = 's32[2]{0}', space=sflag, size = 0x8, scoped, tag = 'scoped memory for tpu_custom_call.1']
    %15 = vsyncpa [#allocation11], 0
    %s16 = scalar_lea.sflag [#allocation11], 1
    %17 = vsyncpa %s16, 0
    loop: start=0, step=1, limit=6
    $region2: #{tpu_custom_call.1} parent=1 // loop_pre_header
      _
    $region3: #{tpu_custom_call.1} parent=1 // loop_header
      %s19 = sphi 0, %s23
      %p20 = scmp.ge.s32.totalorder %s19, 6
      %s26 = sphi 0, %s38
      %s27 = sphi 0, %s34
      %s28 = sphi 0, %s26
      %s29 = sphi 0, %s27
      %s30 = sphi 0, %s28
      %s31 = sphi 0, %s29
      %s43 = sphi 0, %s45
      %s46 = sphi 0, %s43
      %s47 = sphi 0, %s46
      %s63 = sphi 0, %s47
      %s71 = sphi 0, %s73
      %s74 = sphi 0, %s71
      %s75 = sphi 0, %s74
      %s91 = sphi 0, %s75
      %s99 = sphi 0, %s101
      %s102 = sphi 0, %s99
      %s103 = sphi 0, %s102
      %s119 = sphi 0, %s103
      %s127 = sphi 0, %s129
      %s130 = sphi 0, %s127
      %s131 = sphi 0, %s130
      %s147 = sphi 0, %s131
      %s155 = sphi 0, %s157
      %s158 = sphi 0, %s155
      %s159 = sphi 0, %s158
      %s175 = sphi 0, %s159
      %s183 = sphi 0, %s185
      %s186 = sphi 0, %s183
      %s187 = sphi 0, %s186
      %s203 = sphi 0, %s187
      %s211 = sphi 0, %s213
      %s214 = sphi 0, %s211
      %s215 = sphi 0, %s214
      %s231 = sphi 0, %s215
      %s239 = sphi 0, %s241
      %s242 = sphi 0, %s239
      %s243 = sphi 0, %s242
      %s259 = sphi 0, %s243
      %s263 = sphi 0, %s263
      %s265 = sphi 0, %s263
      %s266 = sphi 0, %s265
      %s280 = sphi 0, %s266
      %s284 = sphi 0, %s284
      %s286 = sphi 0, %s284
      %s287 = sphi 0, %s286
      %s301 = sphi 0, %s287
      %s309 = sphi 0, %s311
      %s312 = sphi 0, %s309
      %s313 = sphi 0, %s312
      %s329 = sphi 0, %s313
    $region4: #{tpu_custom_call.1} parent=1 // loop_header_branch
      %22 = sbr.rel (%p20) target = $region8
    $region5: #{tpu_custom_call.1} parent=1 // loop_body
      %s24 = ssub.s32 %s19, 1
      %s25 = ssub.s32 %s19, 2
      %s32 = sadd.s32 1, %s27
      %p33 = scmp.ge.s32.totalorder %s32, 2
      %s34 = scalar_select %p33, 0, %s32
      %s35 = sadd.s32 1, %s26
      %s36 = scalar_select %p33, %s35, %s26
      %p37 = scmp.ge.s32.totalorder %s36, 2
      %s38 = scalar_select %p37, 0, %s36
      %s39 = ssub.s32 %s26, %s38
      %s40 = ssub.s32 %s27, %s34
      %s41 = sor.u32 %s39, %s40
      %p42 = scmp.eq.s32.totalorder %s41, 0
      %s44 = sadd.s32 %s43, 1
      %s45 = scalar_select %p42, %s43, %s44
      %p48 = pneg %p42
      %p49 = scmp.eq.s32.totalorder %s19, 3
      %p50 = por %p48, %p49
      %p51 = scmp.ne.s32.totalorder %s43, %s46
      %p52 = scmp.eq.s32.totalorder %s19, 0
      %p53 = por %p51, %p52
      %p54 = scmp.ne.s32.totalorder %s43, %s46
      %p55 = scmp.eq.s32.totalorder %s24, 3
      %p56 = por %p54, %p55
      %p57 = scmp.ne.s32.totalorder %s46, %s47
      %p58 = scmp.eq.s32.totalorder %s24, 0
      %p59 = por %p57, %p58
      %p60 = scmp.ne.s32.totalorder %s46, %s47
      %p61 = scmp.eq.s32.totalorder %s25, 3
      %p62 = por %p60, %p61
      %p64 = scmp.ne.s32.totalorder %s47, %s63
      %p65 = scmp.eq.s32.totalorder %s25, 0
      %p66 = por %p64, %p65
      %s67 = ssub.s32 %s26, %s38
      %s68 = ssub.s32 %s27, %s34
      %s69 = sor.u32 %s67, %s68
      %p70 = scmp.eq.s32.totalorder %s69, 0
      %s72 = sadd.s32 %s71, 1
      %s73 = scalar_select %p70, %s71, %s72
      %p76 = pneg %p70
      %p77 = scmp.eq.s32.totalorder %s19, 3
      %p78 = por %p76, %p77
      %p79 = scmp.ne.s32.totalorder %s71, %s74
      %p80 = scmp.eq.s32.totalorder %s19, 0
      %p81 = por %p79, %p80
      %p82 = scmp.ne.s32.totalorder %s71, %s74
      %p83 = scmp.eq.s32.totalorder %s24, 3
      %p84 = por %p82, %p83
      %p85 = scmp.ne.s32.totalorder %s74, %s75
      %p86 = scmp.eq.s32.totalorder %s24, 0
      %p87 = por %p85, %p86
      %p88 = scmp.ne.s32.totalorder %s74, %s75
      %p89 = scmp.eq.s32.totalorder %s25, 3
      %p90 = por %p88, %p89
      %p92 = scmp.ne.s32.totalorder %s75, %s91
      %p93 = scmp.eq.s32.totalorder %s25, 0
      %p94 = por %p92, %p93
      %s95 = ssub.s32 %s26, %s38
      %s96 = ssub.s32 %s27, %s34
      %s97 = sor.u32 %s95, %s96
      %p98 = scmp.eq.s32.totalorder %s97, 0
      %s100 = sadd.s32 %s99, 1
      %s101 = scalar_select %p98, %s99, %s100
      %p104 = pneg %p98
      %p105 = scmp.eq.s32.totalorder %s19, 3
      %p106 = por %p104, %p105
      %p107 = scmp.ne.s32.totalorder %s99, %s102
      %p108 = scmp.eq.s32.totalorder %s19, 0
      %p109 = por %p107, %p108
      %p110 = scmp.ne.s32.totalorder %s99, %s102
      %p111 = scmp.eq.s32.totalorder %s24, 3
      %p112 = por %p110, %p111
      %p113 = scmp.ne.s32.totalorder %s102, %s103
      %p114 = scmp.eq.s32.totalorder %s24, 0
      %p115 = por %p113, %p114
      %p116 = scmp.ne.s32.totalorder %s102, %s103
      %p117 = scmp.eq.s32.totalorder %s25, 3
      %p118 = por %p116, %p117
      %p120 = scmp.ne.s32.totalorder %s103, %s119
      %p121 = scmp.eq.s32.totalorder %s25, 0
      %p122 = por %p120, %p121
      %s123 = ssub.s32 %s26, %s38
      %s124 = ssub.s32 %s27, %s34
      %s125 = sor.u32 %s123, %s124
      %p126 = scmp.eq.s32.totalorder %s125, 0
      %s128 = sadd.s32 %s127, 1
      %s129 = scalar_select %p126, %s127, %s128
      %p132 = pneg %p126
      %p133 = scmp.eq.s32.totalorder %s19, 3
      %p134 = por %p132, %p133
      %p135 = scmp.ne.s32.totalorder %s127, %s130
      %p136 = scmp.eq.s32.totalorder %s19, 0
      %p137 = por %p135, %p136
      %p138 = scmp.ne.s32.totalorder %s127, %s130
      %p139 = scmp.eq.s32.totalorder %s24, 3
      %p140 = por %p138, %p139
      %p141 = scmp.ne.s32.totalorder %s130, %s131
      %p142 = scmp.eq.s32.totalorder %s24, 0
      %p143 = por %p141, %p142
      %p144 = scmp.ne.s32.totalorder %s130, %s131
      %p145 = scmp.eq.s32.totalorder %s25, 3
      %p146 = por %p144, %p145
      %p148 = scmp.ne.s32.totalorder %s131, %s147
      %p149 = scmp.eq.s32.totalorder %s25, 0
      %p150 = por %p148, %p149
      %s151 = ssub.s32 %s26, %s38
      %s152 = ssub.s32 %s27, %s34
      %s153 = sor.u32 %s151, %s152
      %p154 = scmp.eq.s32.totalorder %s153, 0
      %s156 = sadd.s32 %s155, 1
      %s157 = scalar_select %p154, %s155, %s156
      %p160 = pneg %p154
      %p161 = scmp.eq.s32.totalorder %s19, 3
      %p162 = por %p160, %p161
      %p163 = scmp.ne.s32.totalorder %s155, %s158
      %p164 = scmp.eq.s32.totalorder %s19, 0
      %p165 = por %p163, %p164
      %p166 = scmp.ne.s32.totalorder %s155, %s158
      %p167 = scmp.eq.s32.totalorder %s24, 3
      %p168 = por %p166, %p167
      %p169 = scmp.ne.s32.totalorder %s158, %s159
      %p170 = scmp.eq.s32.totalorder %s24, 0
      %p171 = por %p169, %p170
      %p172 = scmp.ne.s32.totalorder %s158, %s159
      %p173 = scmp.eq.s32.totalorder %s25, 3
      %p174 = por %p172, %p173
      %p176 = scmp.ne.s32.totalorder %s159, %s175
      %p177 = scmp.eq.s32.totalorder %s25, 0
      %p178 = por %p176, %p177
      %s179 = ssub.s32 %s26, %s38
      %s180 = ssub.s32 %s27, %s34
      %s181 = sor.u32 %s179, %s180
      %p182 = scmp.eq.s32.totalorder %s181, 0
      %s184 = sadd.s32 %s183, 1
      %s185 = scalar_select %p182, %s183, %s184
      %p188 = pneg %p182
      %p189 = scmp.eq.s32.totalorder %s19, 3
      %p190 = por %p188, %p189
      %p191 = scmp.ne.s32.totalorder %s183, %s186
      %p192 = scmp.eq.s32.totalorder %s19, 0
      %p193 = por %p191, %p192
      %p194 = scmp.ne.s32.totalorder %s183, %s186
      %p195 = scmp.eq.s32.totalorder %s24, 3
      %p196 = por %p194, %p195
      %p197 = scmp.ne.s32.totalorder %s186, %s187
      %p198 = scmp.eq.s32.totalorder %s24, 0
      %p199 = por %p197, %p198
      %p200 = scmp.ne.s32.totalorder %s186, %s187
      %p201 = scmp.eq.s32.totalorder %s25, 3
      %p202 = por %p200, %p201
      %p204 = scmp.ne.s32.totalorder %s187, %s203
      %p205 = scmp.eq.s32.totalorder %s25, 0
      %p206 = por %p204, %p205
      %s207 = ssub.s32 %s26, %s38
      %s208 = ssub.s32 %s27, %s34
      %s209 = sor.u32 %s207, %s208
      %p210 = scmp.eq.s32.totalorder %s209, 0
      %s212 = sadd.s32 %s211, 1
      %s213 = scalar_select %p210, %s211, %s212
      %p216 = pneg %p210
      %p217 = scmp.eq.s32.totalorder %s19, 3
      %p218 = por %p216, %p217
      %p219 = scmp.ne.s32.totalorder %s211, %s214
      %p220 = scmp.eq.s32.totalorder %s19, 0
      %p221 = por %p219, %p220
      %p222 = scmp.ne.s32.totalorder %s211, %s214
      %p223 = scmp.eq.s32.totalorder %s24, 3
      %p224 = por %p222, %p223
      %p225 = scmp.ne.s32.totalorder %s214, %s215
      %p226 = scmp.eq.s32.totalorder %s24, 0
      %p227 = por %p225, %p226
      %p228 = scmp.ne.s32.totalorder %s214, %s215
      %p229 = scmp.eq.s32.totalorder %s25, 3
      %p230 = por %p228, %p229
      %p232 = scmp.ne.s32.totalorder %s215, %s231
      %p233 = scmp.eq.s32.totalorder %s25, 0
      %p234 = por %p232, %p233
      %s235 = ssub.s32 %s26, %s38
      %s236 = ssub.s32 %s27, %s34
      %s237 = sor.u32 %s235, %s236
      %p238 = scmp.eq.s32.totalorder %s237, 0
      %s240 = sadd.s32 %s239, 1
      %s241 = scalar_select %p238, %s239, %s240
      %p244 = pneg %p238
      %p245 = scmp.eq.s32.totalorder %s19, 3
      %p246 = por %p244, %p245
      %p247 = scmp.ne.s32.totalorder %s239, %s242
      %p248 = scmp.eq.s32.totalorder %s19, 0
      %p249 = por %p247, %p248
      %p250 = scmp.ne.s32.totalorder %s239, %s242
      %p251 = scmp.eq.s32.totalorder %s24, 3
      %p252 = por %p250, %p251
      %p253 = scmp.ne.s32.totalorder %s242, %s243
      %p254 = scmp.eq.s32.totalorder %s24, 0
      %p255 = por %p253, %p254
      %p256 = scmp.ne.s32.totalorder %s242, %s243
      %p257 = scmp.eq.s32.totalorder %s25, 3
      %p258 = por %p256, %p257
      %p260 = scmp.ne.s32.totalorder %s243, %s259
      %p261 = scmp.eq.s32.totalorder %s25, 0
      %p262 = por %p260, %p261
      %s264 = sadd.s32 %s263, 1
      %p267 = scmp.eq.s32.totalorder %s19, 3
      %p268 = scmp.ne.s32.totalorder %s263, %s265
      %p269 = scmp.eq.s32.totalorder %s19, 0
      %p270 = por %p268, %p269
      %p271 = scmp.ne.s32.totalorder %s263, %s265
      %p272 = scmp.eq.s32.totalorder %s24, 3
      %p273 = por %p271, %p272
      %p274 = scmp.ne.s32.totalorder %s265, %s266
      %p275 = scmp.eq.s32.totalorder %s24, 0
      %p276 = por %p274, %p275
      %p277 = scmp.ne.s32.totalorder %s265, %s266
      %p278 = scmp.eq.s32.totalorder %s25, 3
      %p279 = por %p277, %p278
      %p281 = scmp.ne.s32.totalorder %s266, %s280
      %p282 = scmp.eq.s32.totalorder %s25, 0
      %p283 = por %p281, %p282
      %s285 = sadd.s32 %s284, 1
      %p288 = scmp.eq.s32.totalorder %s19, 3
      %p289 = scmp.ne.s32.totalorder %s284, %s286
      %p290 = scmp.eq.s32.totalorder %s19, 0
      %p291 = por %p289, %p290
      %p292 = scmp.ne.s32.totalorder %s284, %s286
      %p293 = scmp.eq.s32.totalorder %s24, 3
      %p294 = por %p292, %p293
      %p295 = scmp.ne.s32.totalorder %s286, %s287
      %p296 = scmp.eq.s32.totalorder %s24, 0
      %p297 = por %p295, %p296
      %p298 = scmp.ne.s32.totalorder %s286, %s287
      %p299 = scmp.eq.s32.totalorder %s25, 3
      %p300 = por %p298, %p299
      %p302 = scmp.ne.s32.totalorder %s287, %s301
      %p303 = scmp.eq.s32.totalorder %s25, 0
      %p304 = por %p302, %p303
      %s305 = ssub.s32 %s26, %s38
      %s306 = ssub.s32 %s27, %s34
      %s307 = sor.u32 %s305, %s306
      %p308 = scmp.eq.s32.totalorder %s307, 0
      %s310 = sadd.s32 %s309, 1
      %s311 = scalar_select %p308, %s309, %s310
      %p314 = pneg %p308
      %p315 = scmp.eq.s32.totalorder %s19, 3
      %p316 = por %p314, %p315
      %p317 = scmp.ne.s32.totalorder %s309, %s312
      %p318 = scmp.eq.s32.totalorder %s19, 0
      %p319 = por %p317, %p318
      %p320 = scmp.ne.s32.totalorder %s309, %s312
      %p321 = scmp.eq.s32.totalorder %s24, 3
      %p322 = por %p320, %p321
      %p323 = scmp.ne.s32.totalorder %s312, %s313
      %p324 = scmp.eq.s32.totalorder %s24, 0
      %p325 = por %p323, %p324
      %p326 = scmp.ne.s32.totalorder %s312, %s313
      %p327 = scmp.eq.s32.totalorder %s25, 3
      %p328 = por %p326, %p327
      %p330 = scmp.ne.s32.totalorder %s313, %s329
      %p331 = scmp.eq.s32.totalorder %s25, 0
      %p332 = por %p330, %p331
      %p333 = scmp.le.s32.totalorder 1, %s19
      %p334 = scmp.lt.s32.totalorder %s19, 5
      %p335 = pnand %p333, %p334
      %p336 = pneg %p335
      // Predicated region
      $region9: #{tpu_custom_call.1} parent=5 // pred_check
        _
      $region10: #{tpu_custom_call.1} parent=5 // pred_check_branch
        %338 = sbr.rel (%p335) target = $region12
      $region11: #{tpu_custom_call.1} parent=5 // pred_region
        %s339 = ssub.s32 %s19, 1
        // Predicated region
        $region13: #{tpu_custom_call.1} parent=11 // pred_check
          %p340 = pneg %p276
        $region14: #{tpu_custom_call.1} parent=11 // pred_check_branch
          %342 = sbr.rel (%p340) target = $region16
        $region15: #{tpu_custom_call.1} parent=11 // pred_region
          _
        $region16: #{tpu_custom_call.1} parent=11 // pred_fallthru
          _
        // Predicated region
        $region17: #{tpu_custom_call.1} parent=11 // pred_check
          %p343 = pneg %p297
        $region18: #{tpu_custom_call.1} parent=11 // pred_check_branch
          %345 = sbr.rel (%p343) target = $region20
        $region19: #{tpu_custom_call.1} parent=11 // pred_region
          _
        $region20: #{tpu_custom_call.1} parent=11 // pred_fallthru
          _
      $region12: #{tpu_custom_call.1} parent=5 // pred_fallthru
        _
      %p346 = scmp.lt.s32.totalorder %s19, 4
      // Predicated region
      $region21: #{tpu_custom_call.1} parent=5 // pred_check
        %p347 = pneg %p346
      $region22: #{tpu_custom_call.1} parent=5 // pred_check_branch
        %349 = sbr.rel (%p347) target = $region24
      $region23: #{tpu_custom_call.1} parent=5 // pred_region
        // Predicated region
        $region25: #{tpu_custom_call.1} parent=23 // pred_check
          %p350 = pneg %p53
        $region26: #{tpu_custom_call.1} parent=23 // pred_check_branch
          %352 = sbr.rel (%p350) target = $region28
        $region27: #{tpu_custom_call.1} parent=23 // pred_region
          %s353 = sand.u32 %s43, 1
          %s354 = sand.u32 %s43, 1
          %s355 = smul.addr %s354, 20
          %s356 = scalar_lea.vmem [#allocation2], %s355
          %s357 = smul.addr %s26, 10
          %s358 = sadd.s32 %s27, %s357
          %s359 = smul.addr %s358, 4
          %s360 = scalar_lea.vmem %s0, %s359
          // Predicated region
          $region29: #{tpu_custom_call.1} parent=27 // pred_check
            _
          $region30: #{tpu_custom_call.1} parent=27 // pred_check_branch
            %362 = sbr.rel (0) target = $region32
          $region31: #{tpu_custom_call.1} parent=27 // pred_region
            // Predicated region
            $region33: #{tpu_custom_call.1} parent=31 // pred_check
              _
            $region34: #{tpu_custom_call.1} parent=31 // pred_check_branch
              %364 = sbr.rel target = $region36
            $region35: #{tpu_custom_call.1} parent=31 // pred_region
              // Predicated region
              $region48: #{tpu_custom_call.1} parent=35 // pred_check
                _
              $region49: #{tpu_custom_call.1} parent=35 // pred_check_branch
                %388 = sbr.rel (0) target = $region51
              $region50: #{tpu_custom_call.1} parent=35 // pred_region
                loop: start=0, step=1, limit=1
                $region52: #{tpu_custom_call.1} parent=50 // loop_pre_header
                  _
                $region53: #{tpu_custom_call.1} parent=50 // loop_header
                  %s390 = sphi 0, %s394
                  %p391 = scmp.ge.s32.totalorder %s390, 1
                  %s395 = sphi %s360, %s360
                  %s396 = sphi %s356, %s356
                $region54: #{tpu_custom_call.1} parent=50 // loop_header_branch
                  %393 = sbr.rel (%p391) target = $region58
                $region55: #{tpu_custom_call.1} parent=50 // loop_body
                  _
                $region56: #{tpu_custom_call.1} parent=50 // loop_footer
                  %s394 = sadd.s32 1, %s390
                $region57: #{tpu_custom_call.1} parent=50 // loop_footer_branch
                  %389 = sbr.rel target = $region53
                $region58: #{tpu_custom_call.1} parent=50 // loop_exit
                  _
                %s398 = ssub.s32 16, 1
                loop: start=0, step=1, limit=1
                $region59: #{tpu_custom_call.1} parent=50 // loop_pre_header
                  _
                $region60: #{tpu_custom_call.1} parent=50 // loop_header
                  %s400 = sphi 0, %s404
                  %p401 = scmp.ge.s32.totalorder %s400, 1
                  %s405 = sphi %s360, %s360
                  %s406 = sphi %s356, %s356
                $region61: #{tpu_custom_call.1} parent=50 // loop_header_branch
                  %403 = sbr.rel (%p401) target = $region65
                $region62: #{tpu_custom_call.1} parent=50 // loop_body
                  %v407 = vld [vmem:[%s405] sm:%s398]
                  %408 = vst [vmem:[%s406] sm:%s398] %v407
                  %v409 = vld [vmem:[%s405 + $0x8] sm:%s398]
                  %410 = vst [vmem:[%s406 + $0x4] sm:%s398] %v409
                  %v411 = vld [vmem:[%s405 + $0x10] sm:%s398]
                  %412 = vst [vmem:[%s406 + $0x8] sm:%s398] %v411
                  %v413 = vld [vmem:[%s405 + $0x18] sm:%s398]
                  %414 = vst [vmem:[%s406 + $0xc] sm:%s398] %v413
                  %v415 = vld [vmem:[%s405 + $0x20] sm:%s398]
                  %416 = vst [vmem:[%s406 + $0x10] sm:%s398] %v415
                $region63: #{tpu_custom_call.1} parent=50 // loop_footer
                  %s404 = sadd.s32 1, %s400
                $region64: #{tpu_custom_call.1} parent=50 // loop_footer_branch
                  %399 = sbr.rel target = $region60
                $region65: #{tpu_custom_call.1} parent=50 // loop_exit
                  _
              $region51: #{tpu_custom_call.1} parent=35 // pred_fallthru
                _
            $region36: #{tpu_custom_call.1} parent=31 // pred_fallthru
              _
            // Predicated region
            $region37: #{tpu_custom_call.1} parent=31 // pred_check
              _
            $region38: #{tpu_custom_call.1} parent=31 // pred_check_branch
              %366 = sbr.rel (0) target = $region40
            $region39: #{tpu_custom_call.1} parent=31 // pred_region
              %s368 = ssub.s32 16, 1
              loop: start=0, step=1, limit=1
              $region41: #{tpu_custom_call.1} parent=39 // loop_pre_header
                _
              $region42: #{tpu_custom_call.1} parent=39 // loop_header
                %s370 = sphi 0, %s374
                %p371 = scmp.ge.s32.totalorder %s370, 1
                %s375 = sphi %s360, %s360
                %s376 = sphi %s356, %s356
              $region43: #{tpu_custom_call.1} parent=39 // loop_header_branch
                %373 = sbr.rel (%p371) target = $region47
              $region44: #{tpu_custom_call.1} parent=39 // loop_body
                %v377 = vld [vmem:[%s375] sm:%s368]
                %378 = vst [vmem:[%s376] sm:%s368] %v377
                %v379 = vld [vmem:[%s375 + $0x8] sm:%s368]
                %380 = vst [vmem:[%s376 + $0x4] sm:%s368] %v379
                %v381 = vld [vmem:[%s375 + $0x10] sm:%s368]
                %382 = vst [vmem:[%s376 + $0x8] sm:%s368] %v381
                %v383 = vld [vmem:[%s375 + $0x18] sm:%s368]
                %384 = vst [vmem:[%s376 + $0xc] sm:%s368] %v383
                %v385 = vld [vmem:[%s375 + $0x20] sm:%s368]
                %386 = vst [vmem:[%s376 + $0x10] sm:%s368] %v385
              $region45: #{tpu_custom_call.1} parent=39 // loop_footer
                %s374 = sadd.s32 1, %s370
              $region46: #{tpu_custom_call.1} parent=39 // loop_footer_branch
                %369 = sbr.rel target = $region42
              $region47: #{tpu_custom_call.1} parent=39 // loop_exit
                _
            $region40: #{tpu_custom_call.1} parent=31 // pred_fallthru
              _
          $region32: #{tpu_custom_call.1} parent=27 // pred_fallthru
            _
          %417 = vnop
        $region28: #{tpu_custom_call.1} parent=23 // pred_fallthru
          _
        // Predicated region
        $region66: #{tpu_custom_call.1} parent=23 // pred_check
          %p418 = pneg %p81
        $region67: #{tpu_custom_call.1} parent=23 // pred_check_branch
          %420 = sbr.rel (%p418) target = $region69
        $region68: #{tpu_custom_call.1} parent=23 // pred_region
          %s421 = sand.u32 %s71, 1
          %s422 = sand.u32 %s71, 1
          %s423 = smul.addr %s422, 20
          %s424 = scalar_lea.vmem [#allocation3], %s423
          %s425 = smul.addr %s26, 10
          %s426 = sadd.s32 %s27, %s425
          %s427 = smul.addr %s426, 4
          %s428 = scalar_lea.vmem %s1, %s427
          // Predicated region
          $region70: #{tpu_custom_call.1} parent=68 // pred_check
            _
          $region71: #{tpu_custom_call.1} parent=68 // pred_check_branch
            %430 = sbr.rel (0) target = $region73
          $region72: #{tpu_custom_call.1} parent=68 // pred_region
            // Predicated region
            $region74: #{tpu_custom_call.1} parent=72 // pred_check
              _
            $region75: #{tpu_custom_call.1} parent=72 // pred_check_branch
              %432 = sbr.rel target = $region77
            $region76: #{tpu_custom_call.1} parent=72 // pred_region
              // Predicated region
              $region89: #{tpu_custom_call.1} parent=76 // pred_check
                _
              $region90: #{tpu_custom_call.1} parent=76 // pred_check_branch
                %456 = sbr.rel (0) target = $region92
              $region91: #{tpu_custom_call.1} parent=76 // pred_region
                loop: start=0, step=1, limit=1
                $region93: #{tpu_custom_call.1} parent=91 // loop_pre_header
                  _
                $region94: #{tpu_custom_call.1} parent=91 // loop_header
                  %s458 = sphi 0, %s462
                  %p459 = scmp.ge.s32.totalorder %s458, 1
                  %s463 = sphi %s428, %s428
                  %s464 = sphi %s424, %s424
                $region95: #{tpu_custom_call.1} parent=91 // loop_header_branch
                  %461 = sbr.rel (%p459) target = $region99
                $region96: #{tpu_custom_call.1} parent=91 // loop_body
                  _
                $region97: #{tpu_custom_call.1} parent=91 // loop_footer
                  %s462 = sadd.s32 1, %s458
                $region98: #{tpu_custom_call.1} parent=91 // loop_footer_branch
                  %457 = sbr.rel target = $region94
                $region99: #{tpu_custom_call.1} parent=91 // loop_exit
                  _
                %s466 = ssub.s32 16, 1
                loop: start=0, step=1, limit=1
                $region100: #{tpu_custom_call.1} parent=91 // loop_pre_header
                  _
                $region101: #{tpu_custom_call.1} parent=91 // loop_header
                  %s468 = sphi 0, %s472
                  %p469 = scmp.ge.s32.totalorder %s468, 1
                  %s473 = sphi %s428, %s428
                  %s474 = sphi %s424, %s424
                $region102: #{tpu_custom_call.1} parent=91 // loop_header_branch
                  %471 = sbr.rel (%p469) target = $region106
                $region103: #{tpu_custom_call.1} parent=91 // loop_body
                  %v475 = vld [vmem:[%s473] sm:%s466]
                  %476 = vst [vmem:[%s474] sm:%s466] %v475
                  %v477 = vld [vmem:[%s473 + $0x8] sm:%s466]
                  %478 = vst [vmem:[%s474 + $0x4] sm:%s466] %v477
                  %v479 = vld [vmem:[%s473 + $0x10] sm:%s466]
                  %480 = vst [vmem:[%s474 + $0x8] sm:%s466] %v479
                  %v481 = vld [vmem:[%s473 + $0x18] sm:%s466]
                  %482 = vst [vmem:[%s474 + $0xc] sm:%s466] %v481
                  %v483 = vld [vmem:[%s473 + $0x20] sm:%s466]
                  %484 = vst [vmem:[%s474 + $0x10] sm:%s466] %v483
                $region104: #{tpu_custom_call.1} parent=91 // loop_footer
                  %s472 = sadd.s32 1, %s468
                $region105: #{tpu_custom_call.1} parent=91 // loop_footer_branch
                  %467 = sbr.rel target = $region101
                $region106: #{tpu_custom_call.1} parent=91 // loop_exit
                  _
              $region92: #{tpu_custom_call.1} parent=76 // pred_fallthru
                _
            $region77: #{tpu_custom_call.1} parent=72 // pred_fallthru
              _
            // Predicated region
            $region78: #{tpu_custom_call.1} parent=72 // pred_check
              _
            $region79: #{tpu_custom_call.1} parent=72 // pred_check_branch
              %434 = sbr.rel (0) target = $region81
            $region80: #{tpu_custom_call.1} parent=72 // pred_region
              %s436 = ssub.s32 16, 1
              loop: start=0, step=1, limit=1
              $region82: #{tpu_custom_call.1} parent=80 // loop_pre_header
                _
              $region83: #{tpu_custom_call.1} parent=80 // loop_header
                %s438 = sphi 0, %s442
                %p439 = scmp.ge.s32.totalorder %s438, 1
                %s443 = sphi %s428, %s428
                %s444 = sphi %s424, %s424
              $region84: #{tpu_custom_call.1} parent=80 // loop_header_branch
                %441 = sbr.rel (%p439) target = $region88
              $region85: #{tpu_custom_call.1} parent=80 // loop_body
                %v445 = vld [vmem:[%s443] sm:%s436]
                %446 = vst [vmem:[%s444] sm:%s436] %v445
                %v447 = vld [vmem:[%s443 + $0x8] sm:%s436]
                %448 = vst [vmem:[%s444 + $0x4] sm:%s436] %v447
                %v449 = vld [vmem:[%s443 + $0x10] sm:%s436]
                %450 = vst [vmem:[%s444 + $0x8] sm:%s436] %v449
                %v451 = vld [vmem:[%s443 + $0x18] sm:%s436]
                %452 = vst [vmem:[%s444 + $0xc] sm:%s436] %v451
                %v453 = vld [vmem:[%s443 + $0x20] sm:%s436]
                %454 = vst [vmem:[%s444 + $0x10] sm:%s436] %v453
              $region86: #{tpu_custom_call.1} parent=80 // loop_footer
                %s442 = sadd.s32 1, %s438
              $region87: #{tpu_custom_call.1} parent=80 // loop_footer_branch
                %437 = sbr.rel target = $region83
              $region88: #{tpu_custom_call.1} parent=80 // loop_exit
                _
            $region81: #{tpu_custom_call.1} parent=72 // pred_fallthru
              _
          $region73: #{tpu_custom_call.1} parent=68 // pred_fallthru
            _
          %485 = vnop
        $region69: #{tpu_custom_call.1} parent=23 // pred_fallthru
          _
        // Predicated region
        $region107: #{tpu_custom_call.1} parent=23 // pred_check
          %p486 = pneg %p109
        $region108: #{tpu_custom_call.1} parent=23 // pred_check_branch
          %488 = sbr.rel (%p486) target = $region110
        $region109: #{tpu_custom_call.1} parent=23 // pred_region
          %s489 = sand.u32 %s99, 1
          %s490 = sand.u32 %s99, 1
          %s491 = smul.addr %s490, 20
          %s492 = scalar_lea.vmem [#allocation4], %s491
          %s493 = smul.addr %s26, 10
          %s494 = sadd.s32 %s27, %s493
          %s495 = smul.addr %s494, 4
          %s496 = scalar_lea.vmem %s2, %s495
          // Predicated region
          $region111: #{tpu_custom_call.1} parent=109 // pred_check
            _
          $region112: #{tpu_custom_call.1} parent=109 // pred_check_branch
            %498 = sbr.rel (0) target = $region114
          $region113: #{tpu_custom_call.1} parent=109 // pred_region
            // Predicated region
            $region115: #{tpu_custom_call.1} parent=113 // pred_check
              _
            $region116: #{tpu_custom_call.1} parent=113 // pred_check_branch
              %500 = sbr.rel target = $region118
            $region117: #{tpu_custom_call.1} parent=113 // pred_region
              // Predicated region
              $region130: #{tpu_custom_call.1} parent=117 // pred_check
                _
              $region131: #{tpu_custom_call.1} parent=117 // pred_check_branch
                %524 = sbr.rel (0) target = $region133
              $region132: #{tpu_custom_call.1} parent=117 // pred_region
                loop: start=0, step=1, limit=1
                $region134: #{tpu_custom_call.1} parent=132 // loop_pre_header
                  _
                $region135: #{tpu_custom_call.1} parent=132 // loop_header
                  %s526 = sphi 0, %s530
                  %p527 = scmp.ge.s32.totalorder %s526, 1
                  %s531 = sphi %s496, %s496
                  %s532 = sphi %s492, %s492
                $region136: #{tpu_custom_call.1} parent=132 // loop_header_branch
                  %529 = sbr.rel (%p527) target = $region140
                $region137: #{tpu_custom_call.1} parent=132 // loop_body
                  _
                $region138: #{tpu_custom_call.1} parent=132 // loop_footer
                  %s530 = sadd.s32 1, %s526
                $region139: #{tpu_custom_call.1} parent=132 // loop_footer_branch
                  %525 = sbr.rel target = $region135
                $region140: #{tpu_custom_call.1} parent=132 // loop_exit
                  _
                %s534 = ssub.s32 16, 1
                loop: start=0, step=1, limit=1
                $region141: #{tpu_custom_call.1} parent=132 // loop_pre_header
                  _
                $region142: #{tpu_custom_call.1} parent=132 // loop_header
                  %s536 = sphi 0, %s540
                  %p537 = scmp.ge.s32.totalorder %s536, 1
                  %s541 = sphi %s496, %s496
                  %s542 = sphi %s492, %s492
                $region143: #{tpu_custom_call.1} parent=132 // loop_header_branch
                  %539 = sbr.rel (%p537) target = $region147
                $region144: #{tpu_custom_call.1} parent=132 // loop_body
                  %v543 = vld [vmem:[%s541] sm:%s534]
                  %544 = vst [vmem:[%s542] sm:%s534] %v543
                  %v545 = vld [vmem:[%s541 + $0x8] sm:%s534]
                  %546 = vst [vmem:[%s542 + $0x4] sm:%s534] %v545
                  %v547 = vld [vmem:[%s541 + $0x10] sm:%s534]
                  %548 = vst [vmem:[%s542 + $0x8] sm:%s534] %v547
                  %v549 = vld [vmem:[%s541 + $0x18] sm:%s534]
                  %550 = vst [vmem:[%s542 + $0xc] sm:%s534] %v549
                  %v551 = vld [vmem:[%s541 + $0x20] sm:%s534]
                  %552 = vst [vmem:[%s542 + $0x10] sm:%s534] %v551
                $region145: #{tpu_custom_call.1} parent=132 // loop_footer
                  %s540 = sadd.s32 1, %s536
                $region146: #{tpu_custom_call.1} parent=132 // loop_footer_branch
                  %535 = sbr.rel target = $region142
                $region147: #{tpu_custom_call.1} parent=132 // loop_exit
                  _
              $region133: #{tpu_custom_call.1} parent=117 // pred_fallthru
                _
            $region118: #{tpu_custom_call.1} parent=113 // pred_fallthru
              _
            // Predicated region
            $region119: #{tpu_custom_call.1} parent=113 // pred_check
              _
            $region120: #{tpu_custom_call.1} parent=113 // pred_check_branch
              %502 = sbr.rel (0) target = $region122
            $region121: #{tpu_custom_call.1} parent=113 // pred_region
              %s504 = ssub.s32 16, 1
              loop: start=0, step=1, limit=1
              $region123: #{tpu_custom_call.1} parent=121 // loop_pre_header
                _
              $region124: #{tpu_custom_call.1} parent=121 // loop_header
                %s506 = sphi 0, %s510
                %p507 = scmp.ge.s32.totalorder %s506, 1
                %s511 = sphi %s496, %s496
                %s512 = sphi %s492, %s492
              $region125: #{tpu_custom_call.1} parent=121 // loop_header_branch
                %509 = sbr.rel (%p507) target = $region129
              $region126: #{tpu_custom_call.1} parent=121 // loop_body
                %v513 = vld [vmem:[%s511] sm:%s504]
                %514 = vst [vmem:[%s512] sm:%s504] %v513
                %v515 = vld [vmem:[%s511 + $0x8] sm:%s504]
                %516 = vst [vmem:[%s512 + $0x4] sm:%s504] %v515
                %v517 = vld [vmem:[%s511 + $0x10] sm:%s504]
                %518 = vst [vmem:[%s512 + $0x8] sm:%s504] %v517
                %v519 = vld [vmem:[%s511 + $0x18] sm:%s504]
                %520 = vst [vmem:[%s512 + $0xc] sm:%s504] %v519
                %v521 = vld [vmem:[%s511 + $0x20] sm:%s504]
                %522 = vst [vmem:[%s512 + $0x10] sm:%s504] %v521
              $region127: #{tpu_custom_call.1} parent=121 // loop_footer
                %s510 = sadd.s32 1, %s506
              $region128: #{tpu_custom_call.1} parent=121 // loop_footer_branch
                %505 = sbr.rel target = $region124
              $region129: #{tpu_custom_call.1} parent=121 // loop_exit
                _
            $region122: #{tpu_custom_call.1} parent=113 // pred_fallthru
              _
          $region114: #{tpu_custom_call.1} parent=109 // pred_fallthru
            _
          %553 = vnop
        $region110: #{tpu_custom_call.1} parent=23 // pred_fallthru
          _
        // Predicated region
        $region148: #{tpu_custom_call.1} parent=23 // pred_check
          %p554 = pneg %p137
        $region149: #{tpu_custom_call.1} parent=23 // pred_check_branch
          %556 = sbr.rel (%p554) target = $region151
        $region150: #{tpu_custom_call.1} parent=23 // pred_region
          %s557 = sand.u32 %s127, 1
          %s558 = sand.u32 %s127, 1
          %s559 = smul.addr %s558, 20
          %s560 = scalar_lea.vmem [#allocation5], %s559
          %s561 = smul.addr %s26, 10
          %s562 = sadd.s32 %s27, %s561
          %s563 = smul.addr %s562, 4
          %s564 = scalar_lea.vmem %s3, %s563
          // Predicated region
          $region152: #{tpu_custom_call.1} parent=150 // pred_check
            _
          $region153: #{tpu_custom_call.1} parent=150 // pred_check_branch
            %566 = sbr.rel (0) target = $region155
          $region154: #{tpu_custom_call.1} parent=150 // pred_region
            // Predicated region
            $region156: #{tpu_custom_call.1} parent=154 // pred_check
              _
            $region157: #{tpu_custom_call.1} parent=154 // pred_check_branch
              %568 = sbr.rel target = $region159
            $region158: #{tpu_custom_call.1} parent=154 // pred_region
              // Predicated region
              $region171: #{tpu_custom_call.1} parent=158 // pred_check
                _
              $region172: #{tpu_custom_call.1} parent=158 // pred_check_branch
                %592 = sbr.rel (0) target = $region174
              $region173: #{tpu_custom_call.1} parent=158 // pred_region
                loop: start=0, step=1, limit=1
                $region175: #{tpu_custom_call.1} parent=173 // loop_pre_header
                  _
                $region176: #{tpu_custom_call.1} parent=173 // loop_header
                  %s594 = sphi 0, %s598
                  %p595 = scmp.ge.s32.totalorder %s594, 1
                  %s599 = sphi %s564, %s564
                  %s600 = sphi %s560, %s560
                $region177: #{tpu_custom_call.1} parent=173 // loop_header_branch
                  %597 = sbr.rel (%p595) target = $region181
                $region178: #{tpu_custom_call.1} parent=173 // loop_body
                  _
                $region179: #{tpu_custom_call.1} parent=173 // loop_footer
                  %s598 = sadd.s32 1, %s594
                $region180: #{tpu_custom_call.1} parent=173 // loop_footer_branch
                  %593 = sbr.rel target = $region176
                $region181: #{tpu_custom_call.1} parent=173 // loop_exit
                  _
                %s602 = ssub.s32 16, 1
                loop: start=0, step=1, limit=1
                $region182: #{tpu_custom_call.1} parent=173 // loop_pre_header
                  _
                $region183: #{tpu_custom_call.1} parent=173 // loop_header
                  %s604 = sphi 0, %s608
                  %p605 = scmp.ge.s32.totalorder %s604, 1
                  %s609 = sphi %s564, %s564
                  %s610 = sphi %s560, %s560
                $region184: #{tpu_custom_call.1} parent=173 // loop_header_branch
                  %607 = sbr.rel (%p605) target = $region188
                $region185: #{tpu_custom_call.1} parent=173 // loop_body
                  %v611 = vld [vmem:[%s609] sm:%s602]
                  %612 = vst [vmem:[%s610] sm:%s602] %v611
                  %v613 = vld [vmem:[%s609 + $0x8] sm:%s602]
                  %614 = vst [vmem:[%s610 + $0x4] sm:%s602] %v613
                  %v615 = vld [vmem:[%s609 + $0x10] sm:%s602]
                  %616 = vst [vmem:[%s610 + $0x8] sm:%s602] %v615
                  %v617 = vld [vmem:[%s609 + $0x18] sm:%s602]
                  %618 = vst [vmem:[%s610 + $0xc] sm:%s602] %v617
                  %v619 = vld [vmem:[%s609 + $0x20] sm:%s602]
                  %620 = vst [vmem:[%s610 + $0x10] sm:%s602] %v619
                $region186: #{tpu_custom_call.1} parent=173 // loop_footer
                  %s608 = sadd.s32 1, %s604
                $region187: #{tpu_custom_call.1} parent=173 // loop_footer_branch
                  %603 = sbr.rel target = $region183
                $region188: #{tpu_custom_call.1} parent=173 // loop_exit
                  _
              $region174: #{tpu_custom_call.1} parent=158 // pred_fallthru
                _
            $region159: #{tpu_custom_call.1} parent=154 // pred_fallthru
              _
            // Predicated region
            $region160: #{tpu_custom_call.1} parent=154 // pred_check
              _
            $region161: #{tpu_custom_call.1} parent=154 // pred_check_branch
              %570 = sbr.rel (0) target = $region163
            $region162: #{tpu_custom_call.1} parent=154 // pred_region
              %s572 = ssub.s32 16, 1
              loop: start=0, step=1, limit=1
              $region164: #{tpu_custom_call.1} parent=162 // loop_pre_header
                _
              $region165: #{tpu_custom_call.1} parent=162 // loop_header
                %s574 = sphi 0, %s578
                %p575 = scmp.ge.s32.totalorder %s574, 1
                %s579 = sphi %s564, %s564
                %s580 = sphi %s560, %s560
              $region166: #{tpu_custom_call.1} parent=162 // loop_header_branch
                %577 = sbr.rel (%p575) target = $region170
              $region167: #{tpu_custom_call.1} parent=162 // loop_body
                %v581 = vld [vmem:[%s579] sm:%s572]
                %582 = vst [vmem:[%s580] sm:%s572] %v581
                %v583 = vld [vmem:[%s579 + $0x8] sm:%s572]
                %584 = vst [vmem:[%s580 + $0x4] sm:%s572] %v583
                %v585 = vld [vmem:[%s579 + $0x10] sm:%s572]
                %586 = vst [vmem:[%s580 + $0x8] sm:%s572] %v585
                %v587 = vld [vmem:[%s579 + $0x18] sm:%s572]
                %588 = vst [vmem:[%s580 + $0xc] sm:%s572] %v587
                %v589 = vld [vmem:[%s579 + $0x20] sm:%s572]
                %590 = vst [vmem:[%s580 + $0x10] sm:%s572] %v589
              $region168: #{tpu_custom_call.1} parent=162 // loop_footer
                %s578 = sadd.s32 1, %s574
              $region169: #{tpu_custom_call.1} parent=162 // loop_footer_branch
                %573 = sbr.rel target = $region165
              $region170: #{tpu_custom_call.1} parent=162 // loop_exit
                _
            $region163: #{tpu_custom_call.1} parent=154 // pred_fallthru
              _
          $region155: #{tpu_custom_call.1} parent=150 // pred_fallthru
            _
          %621 = vnop
        $region151: #{tpu_custom_call.1} parent=23 // pred_fallthru
          _
        // Predicated region
        $region189: #{tpu_custom_call.1} parent=23 // pred_check
          %p622 = pneg %p165
        $region190: #{tpu_custom_call.1} parent=23 // pred_check_branch
          %624 = sbr.rel (%p622) target = $region192
        $region191: #{tpu_custom_call.1} parent=23 // pred_region
          %s625 = sand.u32 %s155, 1
          %s626 = sand.u32 %s155, 1
          %s627 = smul.addr %s626, 8
          %s628 = scalar_lea.vmem [#allocation6], %s627
          %s629 = smul.addr %s26, 4
          %s630 = sadd.s32 %s27, %s629
          %s631 = smul.addr %s630, 4
          %s632 = scalar_lea.vmem %s4, %s631
          // Predicated region
          $region193: #{tpu_custom_call.1} parent=191 // pred_check
            _
          $region194: #{tpu_custom_call.1} parent=191 // pred_check_branch
            %634 = sbr.rel (0) target = $region196
          $region195: #{tpu_custom_call.1} parent=191 // pred_region
            // Predicated region
            $region197: #{tpu_custom_call.1} parent=195 // pred_check
              _
            $region198: #{tpu_custom_call.1} parent=195 // pred_check_branch
              %636 = sbr.rel target = $region200
            $region199: #{tpu_custom_call.1} parent=195 // pred_region
              // Predicated region
              $region212: #{tpu_custom_call.1} parent=199 // pred_check
                _
              $region213: #{tpu_custom_call.1} parent=199 // pred_check_branch
                %654 = sbr.rel (0) target = $region215
              $region214: #{tpu_custom_call.1} parent=199 // pred_region
                loop: start=0, step=1, limit=1
                $region216: #{tpu_custom_call.1} parent=214 // loop_pre_header
                  _
                $region217: #{tpu_custom_call.1} parent=214 // loop_header
                  %s656 = sphi 0, %s660
                  %p657 = scmp.ge.s32.totalorder %s656, 1
                  %s661 = sphi %s632, %s632
                  %s662 = sphi %s628, %s628
                $region218: #{tpu_custom_call.1} parent=214 // loop_header_branch
                  %659 = sbr.rel (%p657) target = $region222
                $region219: #{tpu_custom_call.1} parent=214 // loop_body
                  _
                $region220: #{tpu_custom_call.1} parent=214 // loop_footer
                  %s660 = sadd.s32 1, %s656
                $region221: #{tpu_custom_call.1} parent=214 // loop_footer_branch
                  %655 = sbr.rel target = $region217
                $region222: #{tpu_custom_call.1} parent=214 // loop_exit
                  _
                %s664 = ssub.s32 16, 1
                loop: start=0, step=1, limit=1
                $region223: #{tpu_custom_call.1} parent=214 // loop_pre_header
                  _
                $region224: #{tpu_custom_call.1} parent=214 // loop_header
                  %s666 = sphi 0, %s670
                  %p667 = scmp.ge.s32.totalorder %s666, 1
                  %s671 = sphi %s632, %s632
                  %s672 = sphi %s628, %s628
                $region225: #{tpu_custom_call.1} parent=214 // loop_header_branch
                  %669 = sbr.rel (%p667) target = $region229
                $region226: #{tpu_custom_call.1} parent=214 // loop_body
                  %v673 = vld [vmem:[%s671] sm:%s664]
                  %674 = vst [vmem:[%s672] sm:%s664] %v673
                  %v675 = vld [vmem:[%s671 + $0x8] sm:%s664]
                  %676 = vst [vmem:[%s672 + $0x4] sm:%s664] %v675
                $region227: #{tpu_custom_call.1} parent=214 // loop_footer
                  %s670 = sadd.s32 1, %s666
                $region228: #{tpu_custom_call.1} parent=214 // loop_footer_branch
                  %665 = sbr.rel target = $region224
                $region229: #{tpu_custom_call.1} parent=214 // loop_exit
                  _
              $region215: #{tpu_custom_call.1} parent=199 // pred_fallthru
                _
            $region200: #{tpu_custom_call.1} parent=195 // pred_fallthru
              _
            // Predicated region
            $region201: #{tpu_custom_call.1} parent=195 // pred_check
              _
            $region202: #{tpu_custom_call.1} parent=195 // pred_check_branch
              %638 = sbr.rel (0) target = $region204
            $region203: #{tpu_custom_call.1} parent=195 // pred_region
              %s640 = ssub.s32 16, 1
              loop: start=0, step=1, limit=1
              $region205: #{tpu_custom_call.1} parent=203 // loop_pre_header
                _
              $region206: #{tpu_custom_call.1} parent=203 // loop_header
                %s642 = sphi 0, %s646
                %p643 = scmp.ge.s32.totalorder %s642, 1
                %s647 = sphi %s632, %s632
                %s648 = sphi %s628, %s628
              $region207: #{tpu_custom_call.1} parent=203 // loop_header_branch
                %645 = sbr.rel (%p643) target = $region211
              $region208: #{tpu_custom_call.1} parent=203 // loop_body
                %v649 = vld [vmem:[%s647] sm:%s640]
                %650 = vst [vmem:[%s648] sm:%s640] %v649
                %v651 = vld [vmem:[%s647 + $0x8] sm:%s640]
                %652 = vst [vmem:[%s648 + $0x4] sm:%s640] %v651
              $region209: #{tpu_custom_call.1} parent=203 // loop_footer
                %s646 = sadd.s32 1, %s642
              $region210: #{tpu_custom_call.1} parent=203 // loop_footer_branch
                %641 = sbr.rel target = $region206
              $region211: #{tpu_custom_call.1} parent=203 // loop_exit
                _
            $region204: #{tpu_custom_call.1} parent=195 // pred_fallthru
              _
          $region196: #{tpu_custom_call.1} parent=191 // pred_fallthru
            _
          %677 = vnop
        $region192: #{tpu_custom_call.1} parent=23 // pred_fallthru
          _
        // Predicated region
        $region230: #{tpu_custom_call.1} parent=23 // pred_check
          %p678 = pneg %p193
        $region231: #{tpu_custom_call.1} parent=23 // pred_check_branch
          %680 = sbr.rel (%p678) target = $region233
        $region232: #{tpu_custom_call.1} parent=23 // pred_region
          %s681 = sand.u32 %s183, 1
          %s682 = sand.u32 %s183, 1
          %s683 = smul.addr %s682, 8
          %s684 = scalar_lea.vmem [#allocation7], %s683
          %s685 = smul.addr %s26, 4
          %s686 = sadd.s32 %s27, %s685
          %s687 = smul.addr %s686, 4
          %s688 = scalar_lea.vmem %s5, %s687
          // Predicated region
          $region234: #{tpu_custom_call.1} parent=232 // pred_check
            _
          $region235: #{tpu_custom_call.1} parent=232 // pred_check_branch
            %690 = sbr.rel (0) target = $region237
          $region236: #{tpu_custom_call.1} parent=232 // pred_region
            // Predicated region
            $region238: #{tpu_custom_call.1} parent=236 // pred_check
              _
            $region239: #{tpu_custom_call.1} parent=236 // pred_check_branch
              %692 = sbr.rel target = $region241
            $region240: #{tpu_custom_call.1} parent=236 // pred_region
              // Predicated region
              $region253: #{tpu_custom_call.1} parent=240 // pred_check
                _
              $region254: #{tpu_custom_call.1} parent=240 // pred_check_branch
                %710 = sbr.rel (0) target = $region256
              $region255: #{tpu_custom_call.1} parent=240 // pred_region
                loop: start=0, step=1, limit=1
                $region257: #{tpu_custom_call.1} parent=255 // loop_pre_header
                  _
                $region258: #{tpu_custom_call.1} parent=255 // loop_header
                  %s712 = sphi 0, %s716
                  %p713 = scmp.ge.s32.totalorder %s712, 1
                  %s717 = sphi %s688, %s688
                  %s718 = sphi %s684, %s684
                $region259: #{tpu_custom_call.1} parent=255 // loop_header_branch
                  %715 = sbr.rel (%p713) target = $region263
                $region260: #{tpu_custom_call.1} parent=255 // loop_body
                  _
                $region261: #{tpu_custom_call.1} parent=255 // loop_footer
                  %s716 = sadd.s32 1, %s712
                $region262: #{tpu_custom_call.1} parent=255 // loop_footer_branch
                  %711 = sbr.rel target = $region258
                $region263: #{tpu_custom_call.1} parent=255 // loop_exit
                  _
                %s720 = ssub.s32 16, 1
                loop: start=0, step=1, limit=1
                $region264: #{tpu_custom_call.1} parent=255 // loop_pre_header
                  _
                $region265: #{tpu_custom_call.1} parent=255 // loop_header
                  %s722 = sphi 0, %s726
                  %p723 = scmp.ge.s32.totalorder %s722, 1
                  %s727 = sphi %s688, %s688
                  %s728 = sphi %s684, %s684
                $region266: #{tpu_custom_call.1} parent=255 // loop_header_branch
                  %725 = sbr.rel (%p723) target = $region270
                $region267: #{tpu_custom_call.1} parent=255 // loop_body
                  %v729 = vld [vmem:[%s727] sm:%s720]
                  %730 = vst [vmem:[%s728] sm:%s720] %v729
                  %v731 = vld [vmem:[%s727 + $0x8] sm:%s720]
                  %732 = vst [vmem:[%s728 + $0x4] sm:%s720] %v731
                $region268: #{tpu_custom_call.1} parent=255 // loop_footer
                  %s726 = sadd.s32 1, %s722
                $region269: #{tpu_custom_call.1} parent=255 // loop_footer_branch
                  %721 = sbr.rel target = $region265
                $region270: #{tpu_custom_call.1} parent=255 // loop_exit
                  _
              $region256: #{tpu_custom_call.1} parent=240 // pred_fallthru
                _
            $region241: #{tpu_custom_call.1} parent=236 // pred_fallthru
              _
            // Predicated region
            $region242: #{tpu_custom_call.1} parent=236 // pred_check
              _
            $region243: #{tpu_custom_call.1} parent=236 // pred_check_branch
              %694 = sbr.rel (0) target = $region245
            $region244: #{tpu_custom_call.1} parent=236 // pred_region
              %s696 = ssub.s32 16, 1
              loop: start=0, step=1, limit=1
              $region246: #{tpu_custom_call.1} parent=244 // loop_pre_header
                _
              $region247: #{tpu_custom_call.1} parent=244 // loop_header
                %s698 = sphi 0, %s702
                %p699 = scmp.ge.s32.totalorder %s698, 1
                %s703 = sphi %s688, %s688
                %s704 = sphi %s684, %s684
              $region248: #{tpu_custom_call.1} parent=244 // loop_header_branch
                %701 = sbr.rel (%p699) target = $region252
              $region249: #{tpu_custom_call.1} parent=244 // loop_body
                %v705 = vld [vmem:[%s703] sm:%s696]
                %706 = vst [vmem:[%s704] sm:%s696] %v705
                %v707 = vld [vmem:[%s703 + $0x8] sm:%s696]
                %708 = vst [vmem:[%s704 + $0x4] sm:%s696] %v707
              $region250: #{tpu_custom_call.1} parent=244 // loop_footer
                %s702 = sadd.s32 1, %s698
              $region251: #{tpu_custom_call.1} parent=244 // loop_footer_branch
                %697 = sbr.rel target = $region247
              $region252: #{tpu_custom_call.1} parent=244 // loop_exit
                _
            $region245: #{tpu_custom_call.1} parent=236 // pred_fallthru
              _
          $region237: #{tpu_custom_call.1} parent=232 // pred_fallthru
            _
          %733 = vnop
        $region233: #{tpu_custom_call.1} parent=23 // pred_fallthru
          _
        // Predicated region
        $region271: #{tpu_custom_call.1} parent=23 // pred_check
          %p734 = pneg %p221
        $region272: #{tpu_custom_call.1} parent=23 // pred_check_branch
          %736 = sbr.rel (%p734) target = $region274
        $region273: #{tpu_custom_call.1} parent=23 // pred_region
          %s737 = sand.u32 %s211, 1
          %s738 = sand.u32 %s211, 1
          %s739 = smul.addr %s738, 8
          %s740 = scalar_lea.vmem [#allocation8], %s739
          %s741 = smul.addr %s26, 4
          %s742 = sadd.s32 %s27, %s741
          %s743 = smul.addr %s742, 4
          %s744 = scalar_lea.vmem %s6, %s743
          // Predicated region
          $region275: #{tpu_custom_call.1} parent=273 // pred_check
            _
          $region276: #{tpu_custom_call.1} parent=273 // pred_check_branch
            %746 = sbr.rel (0) target = $region278
          $region277: #{tpu_custom_call.1} parent=273 // pred_region
            // Predicated region
            $region279: #{tpu_custom_call.1} parent=277 // pred_check
              _
            $region280: #{tpu_custom_call.1} parent=277 // pred_check_branch
              %748 = sbr.rel target = $region282
            $region281: #{tpu_custom_call.1} parent=277 // pred_region
              // Predicated region
              $region294: #{tpu_custom_call.1} parent=281 // pred_check
                _
              $region295: #{tpu_custom_call.1} parent=281 // pred_check_branch
                %766 = sbr.rel (0) target = $region297
              $region296: #{tpu_custom_call.1} parent=281 // pred_region
                loop: start=0, step=1, limit=1
                $region298: #{tpu_custom_call.1} parent=296 // loop_pre_header
                  _
                $region299: #{tpu_custom_call.1} parent=296 // loop_header
                  %s768 = sphi 0, %s772
                  %p769 = scmp.ge.s32.totalorder %s768, 1
                  %s773 = sphi %s744, %s744
                  %s774 = sphi %s740, %s740
                $region300: #{tpu_custom_call.1} parent=296 // loop_header_branch
                  %771 = sbr.rel (%p769) target = $region304
                $region301: #{tpu_custom_call.1} parent=296 // loop_body
                  _
                $region302: #{tpu_custom_call.1} parent=296 // loop_footer
                  %s772 = sadd.s32 1, %s768
                $region303: #{tpu_custom_call.1} parent=296 // loop_footer_branch
                  %767 = sbr.rel target = $region299
                $region304: #{tpu_custom_call.1} parent=296 // loop_exit
                  _
                %s776 = ssub.s32 16, 1
                loop: start=0, step=1, limit=1
                $region305: #{tpu_custom_call.1} parent=296 // loop_pre_header
                  _
                $region306: #{tpu_custom_call.1} parent=296 // loop_header
                  %s778 = sphi 0, %s782
                  %p779 = scmp.ge.s32.totalorder %s778, 1
                  %s783 = sphi %s744, %s744
                  %s784 = sphi %s740, %s740
                $region307: #{tpu_custom_call.1} parent=296 // loop_header_branch
                  %781 = sbr.rel (%p779) target = $region311
                $region308: #{tpu_custom_call.1} parent=296 // loop_body
                  %v785 = vld [vmem:[%s783] sm:%s776]
                  %786 = vst [vmem:[%s784] sm:%s776] %v785
                  %v787 = vld [vmem:[%s783 + $0x8] sm:%s776]
                  %788 = vst [vmem:[%s784 + $0x4] sm:%s776] %v787
                $region309: #{tpu_custom_call.1} parent=296 // loop_footer
                  %s782 = sadd.s32 1, %s778
                $region310: #{tpu_custom_call.1} parent=296 // loop_footer_branch
                  %777 = sbr.rel target = $region306
                $region311: #{tpu_custom_call.1} parent=296 // loop_exit
                  _
              $region297: #{tpu_custom_call.1} parent=281 // pred_fallthru
                _
            $region282: #{tpu_custom_call.1} parent=277 // pred_fallthru
              _
            // Predicated region
            $region283: #{tpu_custom_call.1} parent=277 // pred_check
              _
            $region284: #{tpu_custom_call.1} parent=277 // pred_check_branch
              %750 = sbr.rel (0) target = $region286
            $region285: #{tpu_custom_call.1} parent=277 // pred_region
              %s752 = ssub.s32 16, 1
              loop: start=0, step=1, limit=1
              $region287: #{tpu_custom_call.1} parent=285 // loop_pre_header
                _
              $region288: #{tpu_custom_call.1} parent=285 // loop_header
                %s754 = sphi 0, %s758
                %p755 = scmp.ge.s32.totalorder %s754, 1
                %s759 = sphi %s744, %s744
                %s760 = sphi %s740, %s740
              $region289: #{tpu_custom_call.1} parent=285 // loop_header_branch
                %757 = sbr.rel (%p755) target = $region293
              $region290: #{tpu_custom_call.1} parent=285 // loop_body
                %v761 = vld [vmem:[%s759] sm:%s752]
                %762 = vst [vmem:[%s760] sm:%s752] %v761
                %v763 = vld [vmem:[%s759 + $0x8] sm:%s752]
                %764 = vst [vmem:[%s760 + $0x4] sm:%s752] %v763
              $region291: #{tpu_custom_call.1} parent=285 // loop_footer
                %s758 = sadd.s32 1, %s754
              $region292: #{tpu_custom_call.1} parent=285 // loop_footer_branch
                %753 = sbr.rel target = $region288
              $region293: #{tpu_custom_call.1} parent=285 // loop_exit
                _
            $region286: #{tpu_custom_call.1} parent=277 // pred_fallthru
              _
          $region278: #{tpu_custom_call.1} parent=273 // pred_fallthru
            _
          %789 = vnop
        $region274: #{tpu_custom_call.1} parent=23 // pred_fallthru
          _
        // Predicated region
        $region312: #{tpu_custom_call.1} parent=23 // pred_check
          %p790 = pneg %p249
        $region313: #{tpu_custom_call.1} parent=23 // pred_check_branch
          %792 = sbr.rel (%p790) target = $region315
        $region314: #{tpu_custom_call.1} parent=23 // pred_region
          %s793 = sand.u32 %s239, 1
          %s794 = sand.u32 %s239, 1
          %s795 = smul.addr %s794, 8
          %s796 = scalar_lea.vmem [#allocation9], %s795
          %s797 = smul.addr %s26, 4
          %s798 = sadd.s32 %s27, %s797
          %s799 = smul.addr %s798, 4
          %s800 = scalar_lea.vmem %s7, %s799
          // Predicated region
          $region316: #{tpu_custom_call.1} parent=314 // pred_check
            _
          $region317: #{tpu_custom_call.1} parent=314 // pred_check_branch
            %802 = sbr.rel (0) target = $region319
          $region318: #{tpu_custom_call.1} parent=314 // pred_region
            // Predicated region
            $region320: #{tpu_custom_call.1} parent=318 // pred_check
              _
            $region321: #{tpu_custom_call.1} parent=318 // pred_check_branch
              %804 = sbr.rel target = $region323
            $region322: #{tpu_custom_call.1} parent=318 // pred_region
              // Predicated region
              $region335: #{tpu_custom_call.1} parent=322 // pred_check
                _
              $region336: #{tpu_custom_call.1} parent=322 // pred_check_branch
                %822 = sbr.rel (0) target = $region338
              $region337: #{tpu_custom_call.1} parent=322 // pred_region
                loop: start=0, step=1, limit=1
                $region339: #{tpu_custom_call.1} parent=337 // loop_pre_header
                  _
                $region340: #{tpu_custom_call.1} parent=337 // loop_header
                  %s824 = sphi 0, %s828
                  %p825 = scmp.ge.s32.totalorder %s824, 1
                  %s829 = sphi %s800, %s800
                  %s830 = sphi %s796, %s796
                $region341: #{tpu_custom_call.1} parent=337 // loop_header_branch
                  %827 = sbr.rel (%p825) target = $region345
                $region342: #{tpu_custom_call.1} parent=337 // loop_body
                  _
                $region343: #{tpu_custom_call.1} parent=337 // loop_footer
                  %s828 = sadd.s32 1, %s824
                $region344: #{tpu_custom_call.1} parent=337 // loop_footer_branch
                  %823 = sbr.rel target = $region340
                $region345: #{tpu_custom_call.1} parent=337 // loop_exit
                  _
                %s832 = ssub.s32 16, 1
                loop: start=0, step=1, limit=1
                $region346: #{tpu_custom_call.1} parent=337 // loop_pre_header
                  _
                $region347: #{tpu_custom_call.1} parent=337 // loop_header
                  %s834 = sphi 0, %s838
                  %p835 = scmp.ge.s32.totalorder %s834, 1
                  %s839 = sphi %s800, %s800
                  %s840 = sphi %s796, %s796
                $region348: #{tpu_custom_call.1} parent=337 // loop_header_branch
                  %837 = sbr.rel (%p835) target = $region352
                $region349: #{tpu_custom_call.1} parent=337 // loop_body
                  %v841 = vld [vmem:[%s839] sm:%s832]
                  %842 = vst [vmem:[%s840] sm:%s832] %v841
                  %v843 = vld [vmem:[%s839 + $0x8] sm:%s832]
                  %844 = vst [vmem:[%s840 + $0x4] sm:%s832] %v843
                $region350: #{tpu_custom_call.1} parent=337 // loop_footer
                  %s838 = sadd.s32 1, %s834
                $region351: #{tpu_custom_call.1} parent=337 // loop_footer_branch
                  %833 = sbr.rel target = $region347
                $region352: #{tpu_custom_call.1} parent=337 // loop_exit
                  _
              $region338: #{tpu_custom_call.1} parent=322 // pred_fallthru
                _
            $region323: #{tpu_custom_call.1} parent=318 // pred_fallthru
              _
            // Predicated region
            $region324: #{tpu_custom_call.1} parent=318 // pred_check
              _
            $region325: #{tpu_custom_call.1} parent=318 // pred_check_branch
              %806 = sbr.rel (0) target = $region327
            $region326: #{tpu_custom_call.1} parent=318 // pred_region
              %s808 = ssub.s32 16, 1
              loop: start=0, step=1, limit=1
              $region328: #{tpu_custom_call.1} parent=326 // loop_pre_header
                _
              $region329: #{tpu_custom_call.1} parent=326 // loop_header
                %s810 = sphi 0, %s814
                %p811 = scmp.ge.s32.totalorder %s810, 1
                %s815 = sphi %s800, %s800
                %s816 = sphi %s796, %s796
              $region330: #{tpu_custom_call.1} parent=326 // loop_header_branch
                %813 = sbr.rel (%p811) target = $region334
              $region331: #{tpu_custom_call.1} parent=326 // loop_body
                %v817 = vld [vmem:[%s815] sm:%s808]
                %818 = vst [vmem:[%s816] sm:%s808] %v817
                %v819 = vld [vmem:[%s815 + $0x8] sm:%s808]
                %820 = vst [vmem:[%s816 + $0x4] sm:%s808] %v819
              $region332: #{tpu_custom_call.1} parent=326 // loop_footer
                %s814 = sadd.s32 1, %s810
              $region333: #{tpu_custom_call.1} parent=326 // loop_footer_branch
                %809 = sbr.rel target = $region329
              $region334: #{tpu_custom_call.1} parent=326 // loop_exit
                _
            $region327: #{tpu_custom_call.1} parent=318 // pred_fallthru
              _
          $region319: #{tpu_custom_call.1} parent=314 // pred_fallthru
            _
          %845 = vnop
        $region315: #{tpu_custom_call.1} parent=23 // pred_fallthru
          _
      $region24: #{tpu_custom_call.1} parent=5 // pred_fallthru
        _
      %p846 = scmp.le.s32.totalorder 1, %s19
      %p847 = scmp.lt.s32.totalorder %s19, 5
      %p848 = pnand %p846, %p847
      %p849 = pneg %p848
      // Predicated region
      $region353: #{tpu_custom_call.1} parent=5 // pred_check
        _
      $region354: #{tpu_custom_call.1} parent=5 // pred_check_branch
        %851 = sbr.rel (%p848) target = $region356
      $region355: #{tpu_custom_call.1} parent=5 // pred_region
        %s852 = ssub.s32 %s19, 1
        %s853 = sand.u32 %s46, 1
        %s854 = sand.u32 %s46, 1
        %s855 = smul.addr %s854, 20
        %s856 = scalar_lea.vmem [#allocation2], %s855
        // Predicated region
        $region357: #{tpu_custom_call.1} parent=355 // pred_check
          %p857 = pneg %p59
        $region358: #{tpu_custom_call.1} parent=355 // pred_check_branch
          %859 = sbr.rel (%p857) target = $region360
        $region359: #{tpu_custom_call.1} parent=355 // pred_region
          _
        $region360: #{tpu_custom_call.1} parent=355 // pred_fallthru
          _
        %s860 = sand.u32 %s74, 1
        %s861 = sand.u32 %s74, 1
        %s862 = smul.addr %s861, 20
        %s863 = scalar_lea.vmem [#allocation3], %s862
        // Predicated region
        $region361: #{tpu_custom_call.1} parent=355 // pred_check
          %p864 = pneg %p87
        $region362: #{tpu_custom_call.1} parent=355 // pred_check_branch
          %866 = sbr.rel (%p864) target = $region364
        $region363: #{tpu_custom_call.1} parent=355 // pred_region
          _
        $region364: #{tpu_custom_call.1} parent=355 // pred_fallthru
          _
        %s867 = sand.u32 %s102, 1
        %s868 = sand.u32 %s102, 1
        %s869 = smul.addr %s868, 20
        %s870 = scalar_lea.vmem [#allocation4], %s869
        // Predicated region
        $region365: #{tpu_custom_call.1} parent=355 // pred_check
          %p871 = pneg %p115
        $region366: #{tpu_custom_call.1} parent=355 // pred_check_branch
          %873 = sbr.rel (%p871) target = $region368
        $region367: #{tpu_custom_call.1} parent=355 // pred_region
          _
        $region368: #{tpu_custom_call.1} parent=355 // pred_fallthru
          _
        %s874 = sand.u32 %s130, 1
        %s875 = sand.u32 %s130, 1
        %s876 = smul.addr %s875, 20
        %s877 = scalar_lea.vmem [#allocation5], %s876
        // Predicated region
        $region369: #{tpu_custom_call.1} parent=355 // pred_check
          %p878 = pneg %p143
        $region370: #{tpu_custom_call.1} parent=355 // pred_check_branch
          %880 = sbr.rel (%p878) target = $region372
        $region371: #{tpu_custom_call.1} parent=355 // pred_region
          _
        $region372: #{tpu_custom_call.1} parent=355 // pred_fallthru
          _
        %s881 = sand.u32 %s158, 1
        %s882 = sand.u32 %s158, 1
        %s883 = smul.addr %s882, 8
        %s884 = scalar_lea.vmem [#allocation6], %s883
        // Predicated region
        $region373: #{tpu_custom_call.1} parent=355 // pred_check
          %p885 = pneg %p171
        $region374: #{tpu_custom_call.1} parent=355 // pred_check_branch
          %887 = sbr.rel (%p885) target = $region376
        $region375: #{tpu_custom_call.1} parent=355 // pred_region
          _
        $region376: #{tpu_custom_call.1} parent=355 // pred_fallthru
          _
        %s888 = sand.u32 %s186, 1
        %s889 = sand.u32 %s186, 1
        %s890 = smul.addr %s889, 8
        %s891 = scalar_lea.vmem [#allocation7], %s890
        // Predicated region
        $region377: #{tpu_custom_call.1} parent=355 // pred_check
          %p892 = pneg %p199
        $region378: #{tpu_custom_call.1} parent=355 // pred_check_branch
          %894 = sbr.rel (%p892) target = $region380
        $region379: #{tpu_custom_call.1} parent=355 // pred_region
          _
        $region380: #{tpu_custom_call.1} parent=355 // pred_fallthru
          _
        %s895 = sand.u32 %s214, 1
        %s896 = sand.u32 %s214, 1
        %s897 = smul.addr %s896, 8
        %s898 = scalar_lea.vmem [#allocation8], %s897
        // Predicated region
        $region381: #{tpu_custom_call.1} parent=355 // pred_check
          %p899 = pneg %p227
        $region382: #{tpu_custom_call.1} parent=355 // pred_check_branch
          %901 = sbr.rel (%p899) target = $region384
        $region383: #{tpu_custom_call.1} parent=355 // pred_region
          _
        $region384: #{tpu_custom_call.1} parent=355 // pred_fallthru
          _
        %s902 = sand.u32 %s242, 1
        %s903 = sand.u32 %s242, 1
        %s904 = smul.addr %s903, 8
        %s905 = scalar_lea.vmem [#allocation9], %s904
        // Predicated region
        $region385: #{tpu_custom_call.1} parent=355 // pred_check
          %p906 = pneg %p255
        $region386: #{tpu_custom_call.1} parent=355 // pred_check_branch
          %908 = sbr.rel (%p906) target = $region388
        $region387: #{tpu_custom_call.1} parent=355 // pred_region
          _
        $region388: #{tpu_custom_call.1} parent=355 // pred_fallthru
          _
        %s909 = sand.u32 %s46, 1
        %s910 = sand.u32 %s46, 1
        %s911 = smul.addr %s910, 20
        %s912 = scalar_lea.vmem [#allocation2], %s911
        %p913 = pneg %p59
        %p914 = pneg %p56
        %s915 = sand.u32 %s74, 1
        %s916 = sand.u32 %s74, 1
        %s917 = smul.addr %s916, 20
        %s918 = scalar_lea.vmem [#allocation3], %s917
        %p919 = pneg %p87
        %p920 = pneg %p84
        %s921 = sand.u32 %s102, 1
        %s922 = sand.u32 %s102, 1
        %s923 = smul.addr %s922, 20
        %s924 = scalar_lea.vmem [#allocation4], %s923
        %p925 = pneg %p115
        %p926 = pneg %p112
        %s927 = sand.u32 %s130, 1
        %s928 = sand.u32 %s130, 1
        %s929 = smul.addr %s928, 20
        %s930 = scalar_lea.vmem [#allocation5], %s929
        %p931 = pneg %p143
        %p932 = pneg %p140
        %s933 = sand.u32 %s158, 1
        %s934 = sand.u32 %s158, 1
        %s935 = smul.addr %s934, 8
        %s936 = scalar_lea.vmem [#allocation6], %s935
        %p937 = pneg %p171
        %p938 = pneg %p168
        %s939 = sand.u32 %s186, 1
        %s940 = sand.u32 %s186, 1
        %s941 = smul.addr %s940, 8
        %s942 = scalar_lea.vmem [#allocation7], %s941
        %p943 = pneg %p199
        %p944 = pneg %p196
        %s945 = sand.u32 %s214, 1
        %s946 = sand.u32 %s214, 1
        %s947 = smul.addr %s946, 8
        %s948 = scalar_lea.vmem [#allocation8], %s947
        %p949 = pneg %p227
        %p950 = pneg %p224
        %s951 = sand.u32 %s242, 1
        %s952 = sand.u32 %s242, 1
        %s953 = smul.addr %s952, 8
        %s954 = scalar_lea.vmem [#allocation9], %s953
        %p955 = pneg %p255
        %p956 = pneg %p252
        %p957 = pneg %p276
        %p958 = pneg %p273
        %p959 = pneg %p297
        %p960 = pneg %p294
        %p961 = pneg %p325
        %p962 = pneg %p322
        %s963 = sand.u32 %s312, 1
        %s964 = scalar_lea.sflag [#allocation11], %s963
        %s965 = sand.u32 %s312, 1
        %s966 = smul.addr %s965, 8
        %s967 = scalar_lea.vmem [#allocation10], %s966
        %v968 = vld [vmem:[%s8] sm:$0xff]
        %v969 = vld [vmem:[%s8 + $0x8] sm:$0xff]
        %v970 = vld [vmem:[%s8 + $0x10] sm:$0xff]
        %v971 = vld [vmem:[%s8 + $0x18] sm:$0xff]
        %v972 = vld [vmem:[%s8 + $0x20] sm:$0xf]
        %v973 = vld [vmem:[%s856] sm:$0xf]
        %v974 = vld [vmem:[%s856 + $0x4] sm:$0xf]
        %v975 = vld [vmem:[%s856 + $0x8] sm:$0xf]
        %v976 = vld [vmem:[%s856 + $0xc] sm:$0xf]
        %v977 = vld [vmem:[%s856 + $0x10] sm:$0x3]
        %v978 = vunpack.c.l.bf16 %v973
        %v979 = vunpack.c.l.bf16 %v974
        %v980 = vunpack.c.l.bf16 %v975
        %v981 = vunpack.c.l.bf16 %v976
        %v982 = vunpack.c.l.bf16 %v977
        %v983 = vld [vmem:[%s884] sm:$0xf]
        %v984 = vld [vmem:[%s884 + $0x4] sm:$0x1]
        %v985 = vunpack.c.l.bf16 %v983
        %v986 = vunpack.c.l.bf16 %v984
        %vm987 = vcmask 72704
        %v989 = vsel %vm987, %v968, 0
        %v992 = vsel %vm987, %v969, 0
        %v995 = vsel %vm987, %v970, 0
        %v998 = vsel %vm987, %v971, 0
        %v1001 = vsel %vm987, %v972, 0
        %vm1003 = vcmask 1040384
        %v1005 = vsel %vm1003, %v986, 0
        %1007 = vmatprep.subr.mxu0 0.0
        %1008 = vmatpush1.msra.mxu0 0.0
        %1009 = vmatprep.subr.mxu0 0.0
        %1010 = vmatpush1.msra.mxu0 0.0
        %1011 = vmatprep.subr.mxu0 0.0
        %1012 = vmatpush1.msra.mxu0 0.0
        %1013 = vmatprep.subr.mxu0 0.0
        %1014 = vmatpush1.msra.mxu0 0.0
        %1015 = vmatprep.subr.mxu0 0.0
        %1016 = vmatpush1.msra.mxu0 0.0
        %1017 = vmatprep.subr.mxu0 0.0
        %1018 = vmatpush1.msra.mxu0 0.0
        %1019 = vmatprep.subr.mxu0 0.0
        %1020 = vmatpush1.msra.mxu0 0.0
        %1021 = vmatprep.subr.mxu0 0.0
        %1022 = vmatpush1.msra.mxu0 0.0
        %1023 = vmatprep.subr.mxu0 0.0
        %1024 = vmatpush1.msra.mxu0 0.0
        %1025 = vmatprep.subr.mxu0 0.0
        %1026 = vmatpush1.msra.mxu0 0.0
        %1027 = vmatprep.subr.mxu0 0.0
        %1028 = vmatpush1.msra.mxu0 0.0
        %1029 = vmatprep.subr.mxu0 0.0
        %1030 = vmatpush1.msra.mxu0 0.0
        %1031 = vmatprep.subr.mxu0 0.0
        %1032 = vmatpush1.msra.mxu0 0.0
        %1033 = vmatprep.subr.mxu0 0.0
        %1034 = vmatpush1.msra.mxu0 0.0
        %1035 = vmatprep.subr.mxu0 0.0
        %1036 = vmatpush1.msra.mxu0 %v1005
        %1037 = vmatprep.subr.mxu0 0.0
        %1038 = vmatpush1.msra.mxu0 %v985
        %1039 = vmatprep.subr.mxu0 0.0
        %1040 = vmatpush2.msra.mxu0 0.0
        %1041 = vmatprep.subr.mxu0 0.0
        %1042 = vmatpush2.msra.mxu0 0.0
        %1043 = vmatprep.subr.mxu0 0.0
        %1044 = vmatpush2.msra.mxu0 0.0
        %1045 = vmatprep.subr.mxu0 0.0
        %1046 = vmatpush2.msra.mxu0 0.0
        %1047 = vmatprep.subr.mxu0 0.0
        %1048 = vmatpush2.msra.mxu0 0.0
        %1049 = vmatprep.subr.mxu0 0.0
        %1050 = vmatpush2.msra.mxu0 0.0
        %1051 = vmatprep.subr.mxu0 0.0
        %1052 = vmatpush2.msra.mxu0 0.0
        %1053 = vmatprep.subr.mxu0 0.0
        %1054 = vmatpush2.msra.mxu0 0.0
        %1055 = vmatprep.subr.mxu0 0.0
        %1056 = vmatpush2.msra.mxu0 0.0
        %1057 = vmatprep.subr.mxu0 0.0
        %1058 = vmatpush2.msra.mxu0 0.0
        %1059 = vmatprep.subr.mxu0 0.0
        %1060 = vmatpush2.msra.mxu0 0.0
        %1061 = vmatprep.subr.mxu0 0.0
        %1062 = vmatpush2.msra.mxu0 0.0
        %1063 = vmatprep.subr.mxu0 0.0
        %1064 = vmatpush2.msra.mxu0 0.0
        %1065 = vmatprep.subr.mxu0 0.0
        %1066 = vmatpush2.msra.mxu0 0.0
        %1067 = vmatprep.subr.mxu0 0.0
        %1068 = vmatpush2.msra.mxu0 0.0
        %1069 = vmatprep.subr.mxu0 0.0
        %1070 = vmatpush2.msra.mxu0 0.0
        %1071 = vmatprep.mubr.f32.mxu0 0.0
        %1072 = vmatmul.mubr.f32.gmra.mxu0 %v989
        %v1073 = vpop.f32.mrf.mxu0
        %v1074 = vadd.f32 0.0, %v1073
        %v1075 = vpop.f32.mrf.mxu0
        %1076 = vmatprep.mubr.f32.mxu0 0.0
        %1077 = vmatmul.mubr.f32.gmra.mxu0 %v992
        %v1078 = vpop.f32.mrf.mxu0
        %v1079 = vadd.f32 0.0, %v1078
        %v1080 = vpop.f32.mrf.mxu0
        %1081 = vmatprep.mubr.f32.mxu0 0.0
        %1082 = vmatmul.mubr.f32.gmra.mxu0 %v995
        %v1083 = vpop.f32.mrf.mxu0
        %v1084 = vadd.f32 0.0, %v1083
        %v1085 = vpop.f32.mrf.mxu0
        %1086 = vmatprep.mubr.f32.mxu0 0.0
        %1087 = vmatmul.mubr.f32.gmra.mxu0 %v998
        %v1088 = vpop.f32.mrf.mxu0
        %v1089 = vadd.f32 0.0, %v1088
        %v1090 = vpop.f32.mrf.mxu0
        %1091 = vmatprep.mubr.f32.mxu0 0.0
        %1092 = vmatmul.mubr.f32.gmra.mxu0 %v1001
        %v1093 = vpop.f32.mrf.mxu0
        %v1094 = vadd.f32 0.0, %v1093
        %v1095 = vpop.f32.mrf.mxu0
        %1096 = vdwg.mxu0
        %v1097 = vmul.f32 %v978, %v1074
        %v1098 = vmul.f32 %v979, %v1079
        %v1099 = vmul.f32 %v980, %v1084
        %v1100 = vmul.f32 %v981, %v1089
        %v1101 = vmul.f32 %v982, %v1094
        %v1102 = vld [vmem:[%s863] sm:$0xf]
        %v1103 = vld [vmem:[%s863 + $0x4] sm:$0xf]
        %v1104 = vld [vmem:[%s863 + $0x8] sm:$0xf]
        %v1105 = vld [vmem:[%s863 + $0xc] sm:$0xf]
        %v1106 = vld [vmem:[%s863 + $0x10] sm:$0x3]
        %v1107 = vunpack.c.l.bf16 %v1102
        %v1108 = vunpack.c.l.bf16 %v1103
        %v1109 = vunpack.c.l.bf16 %v1104
        %v1110 = vunpack.c.l.bf16 %v1105
        %v1111 = vunpack.c.l.bf16 %v1106
        %v1112 = vld [vmem:[%s891] sm:$0xf]
        %v1113 = vld [vmem:[%s891 + $0x4] sm:$0x1]
        %v1114 = vunpack.c.l.bf16 %v1112
        %v1115 = vunpack.c.l.bf16 %v1113
        %v1117 = vsel %vm1003, %v1115, 0
        %1119 = vmatprep.subr.mxu0 0.0
        %1120 = vmatpush1.msra.mxu0 0.0
        %1121 = vmatprep.subr.mxu0 0.0
        %1122 = vmatpush1.msra.mxu0 0.0
        %1123 = vmatprep.subr.mxu0 0.0
        %1124 = vmatpush1.msra.mxu0 0.0
        %1125 = vmatprep.subr.mxu0 0.0
        %1126 = vmatpush1.msra.mxu0 0.0
        %1127 = vmatprep.subr.mxu0 0.0
        %1128 = vmatpush1.msra.mxu0 0.0
        %1129 = vmatprep.subr.mxu0 0.0
        %1130 = vmatpush1.msra.mxu0 0.0
        %1131 = vmatprep.subr.mxu0 0.0
        %1132 = vmatpush1.msra.mxu0 0.0
        %1133 = vmatprep.subr.mxu0 0.0
        %1134 = vmatpush1.msra.mxu0 0.0
        %1135 = vmatprep.subr.mxu0 0.0
        %1136 = vmatpush1.msra.mxu0 0.0
        %1137 = vmatprep.subr.mxu0 0.0
        %1138 = vmatpush1.msra.mxu0 0.0
        %1139 = vmatprep.subr.mxu0 0.0
        %1140 = vmatpush1.msra.mxu0 0.0
        %1141 = vmatprep.subr.mxu0 0.0
        %1142 = vmatpush1.msra.mxu0 0.0
        %1143 = vmatprep.subr.mxu0 0.0
        %1144 = vmatpush1.msra.mxu0 0.0
        %1145 = vmatprep.subr.mxu0 0.0
        %1146 = vmatpush1.msra.mxu0 0.0
        %1147 = vmatprep.subr.mxu0 0.0
        %1148 = vmatpush1.msra.mxu0 %v1117
        %1149 = vmatprep.subr.mxu0 0.0
        %1150 = vmatpush1.msra.mxu0 %v1114
        %1151 = vmatprep.subr.mxu0 0.0
        %1152 = vmatpush2.msra.mxu0 0.0
        %1153 = vmatprep.subr.mxu0 0.0
        %1154 = vmatpush2.msra.mxu0 0.0
        %1155 = vmatprep.subr.mxu0 0.0
        %1156 = vmatpush2.msra.mxu0 0.0
        %1157 = vmatprep.subr.mxu0 0.0
        %1158 = vmatpush2.msra.mxu0 0.0
        %1159 = vmatprep.subr.mxu0 0.0
        %1160 = vmatpush2.msra.mxu0 0.0
        %1161 = vmatprep.subr.mxu0 0.0
        %1162 = vmatpush2.msra.mxu0 0.0
        %1163 = vmatprep.subr.mxu0 0.0
        %1164 = vmatpush2.msra.mxu0 0.0
        %1165 = vmatprep.subr.mxu0 0.0
        %1166 = vmatpush2.msra.mxu0 0.0
        %1167 = vmatprep.subr.mxu0 0.0
        %1168 = vmatpush2.msra.mxu0 0.0
        %1169 = vmatprep.subr.mxu0 0.0
        %1170 = vmatpush2.msra.mxu0 0.0
        %1171 = vmatprep.subr.mxu0 0.0
        %1172 = vmatpush2.msra.mxu0 0.0
        %1173 = vmatprep.subr.mxu0 0.0
        %1174 = vmatpush2.msra.mxu0 0.0
        %1175 = vmatprep.subr.mxu0 0.0
        %1176 = vmatpush2.msra.mxu0 0.0
        %1177 = vmatprep.subr.mxu0 0.0
        %1178 = vmatpush2.msra.mxu0 0.0
        %1179 = vmatprep.subr.mxu0 0.0
        %1180 = vmatpush2.msra.mxu0 0.0
        %1181 = vmatprep.subr.mxu0 0.0
        %1182 = vmatpush2.msra.mxu0 0.0
        %1183 = vmatprep.mubr.f32.mxu0 0.0
        %1184 = vmatmul.mubr.f32.gmra.mxu0 %v989
        %v1185 = vpop.f32.mrf.mxu0
        %v1186 = vadd.f32 0.0, %v1185
        %v1187 = vpop.f32.mrf.mxu0
        %1188 = vmatprep.mubr.f32.mxu0 0.0
        %1189 = vmatmul.mubr.f32.gmra.mxu0 %v992
        %v1190 = vpop.f32.mrf.mxu0
        %v1191 = vadd.f32 0.0, %v1190
        %v1192 = vpop.f32.mrf.mxu0
        %1193 = vmatprep.mubr.f32.mxu0 0.0
        %1194 = vmatmul.mubr.f32.gmra.mxu0 %v995
        %v1195 = vpop.f32.mrf.mxu0
        %v1196 = vadd.f32 0.0, %v1195
        %v1197 = vpop.f32.mrf.mxu0
        %1198 = vmatprep.mubr.f32.mxu0 0.0
        %1199 = vmatmul.mubr.f32.gmra.mxu0 %v998
        %v1200 = vpop.f32.mrf.mxu0
        %v1201 = vadd.f32 0.0, %v1200
        %v1202 = vpop.f32.mrf.mxu0
        %1203 = vmatprep.mubr.f32.mxu0 0.0
        %1204 = vmatmul.mubr.f32.gmra.mxu0 %v1001
        %v1205 = vpop.f32.mrf.mxu0
        %v1206 = vadd.f32 0.0, %v1205
        %v1207 = vpop.f32.mrf.mxu0
        %1208 = vdwg.mxu0
        %v1209 = vmul.f32 %v1107, %v1186
        %v1210 = vmul.f32 %v1108, %v1191
        %v1211 = vmul.f32 %v1109, %v1196
        %v1212 = vmul.f32 %v1110, %v1201
        %v1213 = vmul.f32 %v1111, %v1206
        %v1214 = vadd.f32 %v1097, %v1209
        %v1215 = vadd.f32 %v1098, %v1210
        %v1216 = vadd.f32 %v1099, %v1211
        %v1217 = vadd.f32 %v1100, %v1212
        %v1218 = vadd.f32 %v1101, %v1213
        %v1219 = vld [vmem:[%s870] sm:$0xf]
        %v1220 = vld [vmem:[%s870 + $0x4] sm:$0xf]
        %v1221 = vld [vmem:[%s870 + $0x8] sm:$0xf]
        %v1222 = vld [vmem:[%s870 + $0xc] sm:$0xf]
        %v1223 = vld [vmem:[%s870 + $0x10] sm:$0x3]
        %v1224 = vunpack.c.l.bf16 %v1219
        %v1225 = vunpack.c.l.bf16 %v1220
        %v1226 = vunpack.c.l.bf16 %v1221
        %v1227 = vunpack.c.l.bf16 %v1222
        %v1228 = vunpack.c.l.bf16 %v1223
        %v1229 = vld [vmem:[%s898] sm:$0xf]
        %v1230 = vld [vmem:[%s898 + $0x4] sm:$0x1]
        %v1231 = vunpack.c.l.bf16 %v1229
        %v1232 = vunpack.c.l.bf16 %v1230
        %v1234 = vsel %vm1003, %v1232, 0
        %1236 = vmatprep.subr.mxu0 0.0
        %1237 = vmatpush1.msra.mxu0 0.0
        %1238 = vmatprep.subr.mxu0 0.0
        %1239 = vmatpush1.msra.mxu0 0.0
        %1240 = vmatprep.subr.mxu0 0.0
        %1241 = vmatpush1.msra.mxu0 0.0
        %1242 = vmatprep.subr.mxu0 0.0
        %1243 = vmatpush1.msra.mxu0 0.0
        %1244 = vmatprep.subr.mxu0 0.0
        %1245 = vmatpush1.msra.mxu0 0.0
        %1246 = vmatprep.subr.mxu0 0.0
        %1247 = vmatpush1.msra.mxu0 0.0
        %1248 = vmatprep.subr.mxu0 0.0
        %1249 = vmatpush1.msra.mxu0 0.0
        %1250 = vmatprep.subr.mxu0 0.0
        %1251 = vmatpush1.msra.mxu0 0.0
        %1252 = vmatprep.subr.mxu0 0.0
        %1253 = vmatpush1.msra.mxu0 0.0
        %1254 = vmatprep.subr.mxu0 0.0
        %1255 = vmatpush1.msra.mxu0 0.0
        %1256 = vmatprep.subr.mxu0 0.0
        %1257 = vmatpush1.msra.mxu0 0.0
        %1258 = vmatprep.subr.mxu0 0.0
        %1259 = vmatpush1.msra.mxu0 0.0
        %1260 = vmatprep.subr.mxu0 0.0
        %1261 = vmatpush1.msra.mxu0 0.0
        %1262 = vmatprep.subr.mxu0 0.0
        %1263 = vmatpush1.msra.mxu0 0.0
        %1264 = vmatprep.subr.mxu0 0.0
        %1265 = vmatpush1.msra.mxu0 %v1234
        %1266 = vmatprep.subr.mxu0 0.0
        %1267 = vmatpush1.msra.mxu0 %v1231
        %1268 = vmatprep.subr.mxu0 0.0
        %1269 = vmatpush2.msra.mxu0 0.0
        %1270 = vmatprep.subr.mxu0 0.0
        %1271 = vmatpush2.msra.mxu0 0.0
        %1272 = vmatprep.subr.mxu0 0.0
        %1273 = vmatpush2.msra.mxu0 0.0
        %1274 = vmatprep.subr.mxu0 0.0
        %1275 = vmatpush2.msra.mxu0 0.0
        %1276 = vmatprep.subr.mxu0 0.0
        %1277 = vmatpush2.msra.mxu0 0.0
        %1278 = vmatprep.subr.mxu0 0.0
        %1279 = vmatpush2.msra.mxu0 0.0
        %1280 = vmatprep.subr.mxu0 0.0
        %1281 = vmatpush2.msra.mxu0 0.0
        %1282 = vmatprep.subr.mxu0 0.0
        %1283 = vmatpush2.msra.mxu0 0.0
        %1284 = vmatprep.subr.mxu0 0.0
        %1285 = vmatpush2.msra.mxu0 0.0
        %1286 = vmatprep.subr.mxu0 0.0
        %1287 = vmatpush2.msra.mxu0 0.0
        %1288 = vmatprep.subr.mxu0 0.0
        %1289 = vmatpush2.msra.mxu0 0.0
        %1290 = vmatprep.subr.mxu0 0.0
        %1291 = vmatpush2.msra.mxu0 0.0
        %1292 = vmatprep.subr.mxu0 0.0
        %1293 = vmatpush2.msra.mxu0 0.0
        %1294 = vmatprep.subr.mxu0 0.0
        %1295 = vmatpush2.msra.mxu0 0.0
        %1296 = vmatprep.subr.mxu0 0.0
        %1297 = vmatpush2.msra.mxu0 0.0
        %1298 = vmatprep.subr.mxu0 0.0
        %1299 = vmatpush2.msra.mxu0 0.0
        %1300 = vmatprep.mubr.f32.mxu0 0.0
        %1301 = vmatmul.mubr.f32.gmra.mxu0 %v989
        %v1302 = vpop.f32.mrf.mxu0
        %v1303 = vadd.f32 0.0, %v1302
        %v1304 = vpop.f32.mrf.mxu0
        %1305 = vmatprep.mubr.f32.mxu0 0.0
        %1306 = vmatmul.mubr.f32.gmra.mxu0 %v992
        %v1307 = vpop.f32.mrf.mxu0
        %v1308 = vadd.f32 0.0, %v1307
        %v1309 = vpop.f32.mrf.mxu0
        %1310 = vmatprep.mubr.f32.mxu0 0.0
        %1311 = vmatmul.mubr.f32.gmra.mxu0 %v995
        %v1312 = vpop.f32.mrf.mxu0
        %v1313 = vadd.f32 0.0, %v1312
        %v1314 = vpop.f32.mrf.mxu0
        %1315 = vmatprep.mubr.f32.mxu0 0.0
        %1316 = vmatmul.mubr.f32.gmra.mxu0 %v998
        %v1317 = vpop.f32.mrf.mxu0
        %v1318 = vadd.f32 0.0, %v1317
        %v1319 = vpop.f32.mrf.mxu0
        %1320 = vmatprep.mubr.f32.mxu0 0.0
        %1321 = vmatmul.mubr.f32.gmra.mxu0 %v1001
        %v1322 = vpop.f32.mrf.mxu0
        %v1323 = vadd.f32 0.0, %v1322
        %v1324 = vpop.f32.mrf.mxu0
        %1325 = vdwg.mxu0
        %v1326 = vmul.f32 %v1224, %v1303
        %v1327 = vmul.f32 %v1225, %v1308
        %v1328 = vmul.f32 %v1226, %v1313
        %v1329 = vmul.f32 %v1227, %v1318
        %v1330 = vmul.f32 %v1228, %v1323
        %v1331 = vadd.f32 %v1214, %v1326
        %v1332 = vadd.f32 %v1215, %v1327
        %v1333 = vadd.f32 %v1216, %v1328
        %v1334 = vadd.f32 %v1217, %v1329
        %v1335 = vadd.f32 %v1218, %v1330
        %v1336 = vld [vmem:[%s877] sm:$0xf]
        %v1337 = vld [vmem:[%s877 + $0x4] sm:$0xf]
        %v1338 = vld [vmem:[%s877 + $0x8] sm:$0xf]
        %v1339 = vld [vmem:[%s877 + $0xc] sm:$0xf]
        %v1340 = vld [vmem:[%s877 + $0x10] sm:$0x3]
        %v1341 = vunpack.c.l.bf16 %v1336
        %v1342 = vunpack.c.l.bf16 %v1337
        %v1343 = vunpack.c.l.bf16 %v1338
        %v1344 = vunpack.c.l.bf16 %v1339
        %v1345 = vunpack.c.l.bf16 %v1340
        %v1346 = vld [vmem:[%s905] sm:$0xf]
        %v1347 = vld [vmem:[%s905 + $0x4] sm:$0x1]
        %v1348 = vunpack.c.l.bf16 %v1346
        %v1349 = vunpack.c.l.bf16 %v1347
        %v1351 = vsel %vm1003, %v1349, 0
        %1353 = vmatprep.subr.mxu0 0.0
        %1354 = vmatpush1.msra.mxu0 0.0
        %1355 = vmatprep.subr.mxu0 0.0
        %1356 = vmatpush1.msra.mxu0 0.0
        %1357 = vmatprep.subr.mxu0 0.0
        %1358 = vmatpush1.msra.mxu0 0.0
        %1359 = vmatprep.subr.mxu0 0.0
        %1360 = vmatpush1.msra.mxu0 0.0
        %1361 = vmatprep.subr.mxu0 0.0
        %1362 = vmatpush1.msra.mxu0 0.0
        %1363 = vmatprep.subr.mxu0 0.0
        %1364 = vmatpush1.msra.mxu0 0.0
        %1365 = vmatprep.subr.mxu0 0.0
        %1366 = vmatpush1.msra.mxu0 0.0
        %1367 = vmatprep.subr.mxu0 0.0
        %1368 = vmatpush1.msra.mxu0 0.0
        %1369 = vmatprep.subr.mxu0 0.0
        %1370 = vmatpush1.msra.mxu0 0.0
        %1371 = vmatprep.subr.mxu0 0.0
        %1372 = vmatpush1.msra.mxu0 0.0
        %1373 = vmatprep.subr.mxu0 0.0
        %1374 = vmatpush1.msra.mxu0 0.0
        %1375 = vmatprep.subr.mxu0 0.0
        %1376 = vmatpush1.msra.mxu0 0.0
        %1377 = vmatprep.subr.mxu0 0.0
        %1378 = vmatpush1.msra.mxu0 0.0
        %1379 = vmatprep.subr.mxu0 0.0
        %1380 = vmatpush1.msra.mxu0 0.0
        %1381 = vmatprep.subr.mxu0 0.0
        %1382 = vmatpush1.msra.mxu0 %v1351
        %1383 = vmatprep.subr.mxu0 0.0
        %1384 = vmatpush1.msra.mxu0 %v1348
        %1385 = vmatprep.subr.mxu0 0.0
        %1386 = vmatpush2.msra.mxu0 0.0
        %1387 = vmatprep.subr.mxu0 0.0
        %1388 = vmatpush2.msra.mxu0 0.0
        %1389 = vmatprep.subr.mxu0 0.0
        %1390 = vmatpush2.msra.mxu0 0.0
        %1391 = vmatprep.subr.mxu0 0.0
        %1392 = vmatpush2.msra.mxu0 0.0
        %1393 = vmatprep.subr.mxu0 0.0
        %1394 = vmatpush2.msra.mxu0 0.0
        %1395 = vmatprep.subr.mxu0 0.0
        %1396 = vmatpush2.msra.mxu0 0.0
        %1397 = vmatprep.subr.mxu0 0.0
        %1398 = vmatpush2.msra.mxu0 0.0
        %1399 = vmatprep.subr.mxu0 0.0
        %1400 = vmatpush2.msra.mxu0 0.0
        %1401 = vmatprep.subr.mxu0 0.0
        %1402 = vmatpush2.msra.mxu0 0.0
        %1403 = vmatprep.subr.mxu0 0.0
        %1404 = vmatpush2.msra.mxu0 0.0
        %1405 = vmatprep.subr.mxu0 0.0
        %1406 = vmatpush2.msra.mxu0 0.0
        %1407 = vmatprep.subr.mxu0 0.0
        %1408 = vmatpush2.msra.mxu0 0.0
        %1409 = vmatprep.subr.mxu0 0.0
        %1410 = vmatpush2.msra.mxu0 0.0
        %1411 = vmatprep.subr.mxu0 0.0
        %1412 = vmatpush2.msra.mxu0 0.0
        %1413 = vmatprep.subr.mxu0 0.0
        %1414 = vmatpush2.msra.mxu0 0.0
        %1415 = vmatprep.subr.mxu0 0.0
        %1416 = vmatpush2.msra.mxu0 0.0
        %1417 = vmatprep.mubr.f32.mxu0 0.0
        %1418 = vmatmul.mubr.f32.gmra.mxu0 %v989
        %v1419 = vpop.f32.mrf.mxu0
        %v1420 = vadd.f32 0.0, %v1419
        %v1421 = vpop.f32.mrf.mxu0
        %1422 = vmatprep.mubr.f32.mxu0 0.0
        %1423 = vmatmul.mubr.f32.gmra.mxu0 %v992
        %v1424 = vpop.f32.mrf.mxu0
        %v1425 = vadd.f32 0.0, %v1424
        %v1426 = vpop.f32.mrf.mxu0
        %1427 = vmatprep.mubr.f32.mxu0 0.0
        %1428 = vmatmul.mubr.f32.gmra.mxu0 %v995
        %v1429 = vpop.f32.mrf.mxu0
        %v1430 = vadd.f32 0.0, %v1429
        %v1431 = vpop.f32.mrf.mxu0
        %1432 = vmatprep.mubr.f32.mxu0 0.0
        %1433 = vmatmul.mubr.f32.gmra.mxu0 %v998
        %v1434 = vpop.f32.mrf.mxu0
        %v1435 = vadd.f32 0.0, %v1434
        %v1436 = vpop.f32.mrf.mxu0
        %1437 = vmatprep.mubr.f32.mxu0 0.0
        %1438 = vmatmul.mubr.f32.gmra.mxu0 %v1001
        %v1439 = vpop.f32.mrf.mxu0
        %v1440 = vadd.f32 0.0, %v1439
        %v1441 = vpop.f32.mrf.mxu0
        %1442 = vdwg.mxu0
        %v1443 = vmul.f32 %v1341, %v1420
        %v1444 = vmul.f32 %v1342, %v1425
        %v1445 = vmul.f32 %v1343, %v1430
        %v1446 = vmul.f32 %v1344, %v1435
        %v1447 = vmul.f32 %v1345, %v1440
        %v1448 = vadd.f32 %v1331, %v1443
        %v1449 = vadd.f32 %v1332, %v1444
        %v1450 = vadd.f32 %v1333, %v1445
        %v1451 = vadd.f32 %v1334, %v1446
        %v1452 = vadd.f32 %v1335, %v1447
        %v1453 = vld [vmem:[%s9] sm:$0xff]
        %vm1454 = vcmask 293888
        %v1456 = vsel %vm1454, %v1453, 0
        %vm1458 = vcmask 1043456
        %v1460 = vsel %vm1458, %v1452, 0
        %1462 = vmatprep.subr.mxu0 0.0
        %1463 = vmatpush1.msra.mxu0 0.0
        %1464 = vmatprep.subr.mxu0 0.0
        %1465 = vmatpush1.msra.mxu0 0.0
        %1466 = vmatprep.subr.mxu0 0.0
        %1467 = vmatpush1.msra.mxu0 0.0
        %1468 = vmatprep.subr.mxu0 0.0
        %1469 = vmatpush1.msra.mxu0 0.0
        %1470 = vmatprep.subr.mxu0 0.0
        %1471 = vmatpush1.msra.mxu0 0.0
        %1472 = vmatprep.subr.mxu0 0.0
        %1473 = vmatpush1.msra.mxu0 0.0
        %1474 = vmatprep.subr.mxu0 0.0
        %1475 = vmatpush1.msra.mxu0 0.0
        %1476 = vmatprep.subr.mxu0 0.0
        %1477 = vmatpush1.msra.mxu0 0.0
        %1478 = vmatprep.subr.mxu0 0.0
        %1479 = vmatpush1.msra.mxu0 0.0
        %1480 = vmatprep.subr.mxu0 0.0
        %1481 = vmatpush1.msra.mxu0 0.0
        %1482 = vmatprep.subr.mxu0 0.0
        %1483 = vmatpush1.msra.mxu0 0.0
        %1484 = vmatprep.subr.mxu0 0.0
        %1485 = vmatpush1.msra.mxu0 %v1460
        %1486 = vmatprep.subr.mxu0 0.0
        %1487 = vmatpush1.msra.mxu0 %v1451
        %1488 = vmatprep.subr.mxu0 0.0
        %1489 = vmatpush1.msra.mxu0 %v1450
        %1490 = vmatprep.subr.mxu0 0.0
        %1491 = vmatpush1.msra.mxu0 %v1449
        %1492 = vmatprep.subr.mxu0 0.0
        %1493 = vmatpush1.msra.mxu0 %v1448
        %1494 = vmatprep.subr.mxu0 0.0
        %1495 = vmatpush2.msra.mxu0 0.0
        %1496 = vmatprep.subr.mxu0 0.0
        %1497 = vmatpush2.msra.mxu0 0.0
        %1498 = vmatprep.subr.mxu0 0.0
        %1499 = vmatpush2.msra.mxu0 0.0
        %1500 = vmatprep.subr.mxu0 0.0
        %1501 = vmatpush2.msra.mxu0 0.0
        %1502 = vmatprep.subr.mxu0 0.0
        %1503 = vmatpush2.msra.mxu0 0.0
        %1504 = vmatprep.subr.mxu0 0.0
        %1505 = vmatpush2.msra.mxu0 0.0
        %1506 = vmatprep.subr.mxu0 0.0
        %1507 = vmatpush2.msra.mxu0 0.0
        %1508 = vmatprep.subr.mxu0 0.0
        %1509 = vmatpush2.msra.mxu0 0.0
        %1510 = vmatprep.subr.mxu0 0.0
        %1511 = vmatpush2.msra.mxu0 0.0
        %1512 = vmatprep.subr.mxu0 0.0
        %1513 = vmatpush2.msra.mxu0 0.0
        %1514 = vmatprep.subr.mxu0 0.0
        %1515 = vmatpush2.msra.mxu0 0.0
        %1516 = vmatprep.subr.mxu0 0.0
        %1517 = vmatpush2.msra.mxu0 0.0
        %1518 = vmatprep.subr.mxu0 0.0
        %1519 = vmatpush2.msra.mxu0 0.0
        %1520 = vmatprep.subr.mxu0 0.0
        %1521 = vmatpush2.msra.mxu0 0.0
        %1522 = vmatprep.subr.mxu0 0.0
        %1523 = vmatpush2.msra.mxu0 0.0
        %1524 = vmatprep.subr.mxu0 0.0
        %1525 = vmatpush2.msra.mxu0 0.0
        %1526 = vmatprep.mubr.f32.mxu0 0.0
        %1527 = vmatmul.mubr.f32.gmra.mxu0 %v1456
        %v1528 = vpop.f32.mrf.mxu0
        %v1529 = vadd.f32 0.0, %v1528
        %v1530 = vpop.f32.mrf.mxu0
        %1531 = vdwg.mxu0
        %v1532 = vmax.f32 %v1529, 0.0
        %1533 = vst [vmem:[%s967] sm:$0xff] %v1532
        %s1534 = sand.u32 %s312, 1
        %s1535 = scalar_lea.sflag [#allocation11], %s1534
        %s1536 = sand.u32 %s312, 1
        %s1537 = smul.addr %s1536, 8
        %s1538 = scalar_lea.vmem [#allocation10], %s1537
        // Predicated region
        $region389: #{tpu_custom_call.1} parent=355 // pred_check
          %p1539 = pneg %p322
        $region390: #{tpu_custom_call.1} parent=355 // pred_check_branch
          %1541 = sbr.rel (%p1539) target = $region392
        $region391: #{tpu_custom_call.1} parent=355 // pred_region
          %s1543 = ssub.s32 128, 128
          %1544 = vsyncadd %s1535, %s1543
          %s1545 = smul.addr %s28, 2
          %s1546 = sadd.s32 %s29, %s1545
          %s1547 = smul.addr %s1546, 128
          %s1548 = scalar_lea.hbm %s10, %s1547
          %s1550 = sshll.u32 %s1538, 4
          %s1551 = int_to_ptr.vmem [resolvable:$true] %s1550
          %1553 = dma.vmem_to_hbm [thread:$0]  %s1551, 128, %s1548, %s1535
        $region392: #{tpu_custom_call.1} parent=355 // pred_fallthru
          _
      $region356: #{tpu_custom_call.1} parent=5 // pred_fallthru
        _
      %p1554 = scmp.le.s32.totalorder 2, %s19
      // Predicated region
      $region393: #{tpu_custom_call.1} parent=5 // pred_check
        %p1555 = pneg %p1554
      $region394: #{tpu_custom_call.1} parent=5 // pred_check_branch
        %1557 = sbr.rel (%p1555) target = $region396
      $region395: #{tpu_custom_call.1} parent=5 // pred_region
        %s1558 = ssub.s32 %s19, 2
        // Predicated region
        $region397: #{tpu_custom_call.1} parent=395 // pred_check
          %p1559 = pneg %p328
        $region398: #{tpu_custom_call.1} parent=395 // pred_check_branch
          %1561 = sbr.rel (%p1559) target = $region400
        $region399: #{tpu_custom_call.1} parent=395 // pred_region
          %s1562 = sand.u32 %s313, 1
          %s1563 = scalar_lea.sflag [#allocation11], %s1562
          %s1564 = sand.u32 %s313, 1
          %s1565 = smul.addr %s1564, 8
          %s1566 = scalar_lea.vmem [#allocation10], %s1565
          %1567 = dma.done %s1563, 128
        $region400: #{tpu_custom_call.1} parent=395 // pred_fallthru
          _
      $region396: #{tpu_custom_call.1} parent=5 // pred_fallthru
        _
    $region6: #{tpu_custom_call.1} parent=1 // loop_footer
      %s23 = sadd.s32 1, %s19
    $region7: #{tpu_custom_call.1} parent=1 // loop_footer_branch
      %18 = sbr.rel target = $region3
    $region8: #{tpu_custom_call.1} parent=1 // loop_exit
      _
    %1568 = vsyncpa [#allocation11], 1
    %s1569 = scalar_lea.sflag [#allocation11], 1
    %1570 = vsyncpa %s1569, 1

</llo_original>
